<compile_context>
chip_gen: v7x
topology: tpu7x:2x2x1
jax: 0.10.0
libtpu: 0.0.40
codegen_flags: <defaults>
</compile_context>

<pallas_src>
import jax
import jax.numpy as jnp
from jax.experimental import pallas as pl
from jax.experimental.pallas import tpu as pltpu


# ----------------------------------------------------------------------------
# Fused propagation + 1x1-conv kernel (per tile of the flattened (N*L) axis).
# ----------------------------------------------------------------------------
def _make_mixprop_kernel(gdep, alpha, compute_dtype):
    alpha = float(alpha)

    def kernel(x_ref, at_ref, w_ref, b_ref, o_ref):
        # x_ref  : (T, C, V)          tile of (n,l) rows, nodes last
        # at_ref : (V, V)             A_eff^T (resident, compute dtype)
        # w_ref  : (G, C, c_out)      1x1-conv weight split per hop (resident)
        # b_ref  : (1, c_out)         bias (resident, f32)
        # o_ref  : (T, V, c_out)
        T, C, V = x_ref.shape
        c_out = o_ref.shape[-1]

        x_f32 = x_ref[...].astype(jnp.float32)            # (T, C, V)
        a_t = at_ref[...]                                  # (V, V) compute dtype
        bias = b_ref[...].astype(jnp.float32)              # (1, c_out)

        def chan_mix(h_f32, g):
            # (T, C, V) -> (T, V, C): minor-dims swap (XLU slot), then a FREE
            # leading merge; one (T*V, C) @ (C, c_out) MXU matmul per hop.
            hc = jnp.swapaxes(h_f32, 1, 2).reshape(T * V, C).astype(compute_dtype)
            return jnp.dot(hc, w_ref[g], preferred_element_type=jnp.float32)

        # hop 0: bias folded into the accumulator init; register accumulation
        # (no VMEM scratch -> no per-hop VMEM round trips).
        acc = chan_mix(x_f32, 0) + bias                    # (T*V, c_out) f32

        h = x_f32
        for g in range(1, gdep + 1):
            # node mix: ONE un-batched matmul, M = T*C rows, contraction over
            # the node axis; bf16 operands, f32 accumulation on the MXU.
            hn = jnp.dot(h.reshape(T * C, V).astype(compute_dtype), a_t,
                         preferred_element_type=jnp.float32).reshape(T, C, V)
            # alpha mix stays in f32 on the VPU.
            h = alpha * x_f32 + (1.0 - alpha) * hn
            # fused 1x1-conv contribution of hop g.
            acc = acc + chan_mix(h, g)

        # (T*V, c_out) -> (T, V, c_out) is a free leading split.
        o_ref[...] = acc.reshape(T, V, c_out).astype(o_ref.dtype)

    return kernel


def _pick_tile_rows(nl, tile_rows):
    """Tile size over the flattened (N*L) axis.

    - as large as requested (default 256) to amortize per-grid-step overhead,
    - but at least 2 grid steps when there is enough work (v7x: 2 TensorCores),
    - sublane-aligned (multiple of 8).
    """
    t = max(8, min(int(tile_rows), (nl + 1) // 2))
    t = ((t + 7) // 8) * 8
    nl_aligned = ((nl + 7) // 8) * 8
    return min(t, nl_aligned)


def mixprop_forward(x, adj_3d, weight, bias, *, gdep, alpha,
                    tile_rows=256, compute_dtype=jnp.bfloat16):
    """Equivalent of mixprop.forward.

    x:       (N, C, V, L)   PyTorch 'ncwl': batch, channels, nodes, time
    adj_3d:  (A, V, V)
    weight:  (c_out, (gdep+1)*C, 1, 1)   Conv2d 1x1 weight of self.mlp
    bias:    (c_out,)
    returns  (N, c_out, V, L)
    """
    N, C, V, L = x.shape
    assert adj_3d.shape[1] == V and adj_3d.shape[2] == V
    c_out, cin_tot, kh, kw = weight.shape
    G = gdep + 1
    assert cin_tot == G * C and kh == 1 and kw == 1

    # ---- effective mixing matrix, plain JAX (tiny reduction; no kernel launch) ----
    adj = adj_3d.astype(jnp.float32) + jnp.eye(V, dtype=jnp.float32)[None]
    a_eff = jnp.sum(adj / jnp.sum(adj, axis=2, keepdims=True), axis=0)   # (V, V)
    a_t = a_eff.T.astype(compute_dtype)            # right-multiply form: h @ A_eff^T

    # ---- 1x1-conv weight per hop: (c_out, G*C) -> (G, C, c_out), matching
    #      torch.cat channel order g*C + c; bias kept f32 ----
    w_k = jnp.transpose(weight[:, :, 0, 0].reshape(c_out, G, C), (1, 2, 0))
    w_k = w_k.astype(compute_dtype)
    b_k = bias.reshape(1, c_out).astype(jnp.float32)

    # ---- rows = flattened (n, l); x stays in its original dtype ----
    NL = N * L
    x_k = jnp.transpose(x, (0, 3, 1, 2)).reshape(NL, C, V)

    T = _pick_tile_rows(NL, tile_rows)
    pad = (-NL) % T
    if pad:                               # keep the grid exact; sliced off below
        x_k = jnp.pad(x_k, ((0, pad), (0, 0), (0, 0)))
    NL_p = NL + pad

    kernel = _make_mixprop_kernel(gdep, alpha, compute_dtype)

    out = pl.pallas_call(
        kernel,
        out_shape=jax.ShapeDtypeStruct((NL_p, V, c_out), x.dtype),
        grid=(NL_p // T,),
        in_specs=[
            pl.BlockSpec((T, C, V), lambda i: (i, 0, 0)),
            pl.BlockSpec((V, V), lambda i: (0, 0)),
            pl.BlockSpec((G, C, c_out), lambda i: (0, 0, 0)),
            pl.BlockSpec((1, c_out), lambda i: (0, 0)),
        ],
        out_specs=pl.BlockSpec((T, V, c_out), lambda i: (i, 0, 0)),
        compiler_params=pltpu.CompilerParams(
            dimension_semantics=("parallel",)),
    )(x_k, a_t, w_k, b_k)

    out = out[:NL].reshape(N, L, V, c_out)
    # (N, L, V, c_out) -> (N, c_out, V, L)
    return jnp.transpose(out, (0, 3, 2, 1))


# ----------------------------------------------------------------------------
# Pure-JAX reference (mirrors the PyTorch forward exactly, f32 HIGHEST)
# ----------------------------------------------------------------------------
def _reference_mixprop(x, adj_3d, weight, bias, gdep, alpha):
    V = adj_3d.shape[1]
    adj = adj_3d + jnp.eye(V, dtype=adj_3d.dtype)[None]
    d = jnp.sum(adj, axis=2, keepdims=True)
    a = adj / d
    hi = jax.lax.Precision.HIGHEST
    h = x
    out = [h]
    for _ in range(gdep):
        hn = jnp.einsum("ncwl,avw->ncvl", h, a, precision=hi)
        h = alpha * x + (1 - alpha) * hn
        out.append(h)
    ho = jnp.concatenate(out, axis=1)
    w2d = weight[:, :, 0, 0]
    return jnp.einsum("ngvl,og->novl", ho, w2d, precision=hi) \
        + bias[None, :, None, None]


if __name__ == "__main__":
    key = jax.random.PRNGKey(0)
    kx, ka, kw, kb = jax.random.split(key, 4)

    # Small shapes consistent with the module: batch=2, c_in=4, nodes=16, seq=8.
    N, C_in, V, L = 2, 4, 16, 8
    gdep, alpha, c_out = 2, 0.05, 8
    G = gdep + 1

    x = jax.random.normal(kx, (N, C_in, V, L), dtype=jnp.float32)
    adj_3d = jax.random.uniform(ka, (N, V, V), jnp.float32, 0.0, 1.0)

    # PyTorch-style uniform init bound 1/sqrt(fan_in) for the 1x1 conv.
    bound = 1.0 / (G * C_in) ** 0.5
    weight = jax.random.uniform(kw, (c_out, G * C_in, 1, 1), jnp.float32, -bound, bound)
    bias = jax.random.uniform(kb, (c_out,), jnp.float32, -bound, bound)

    y = mixprop_forward(x, adj_3d, weight, bias, gdep=gdep, alpha=alpha)
    y = jax.block_until_ready(y)

    y_ref = _reference_mixprop(x, adj_3d, weight, bias, gdep, alpha)
    assert y.shape == (N, c_out, V, L), y.shape
    # bf16 MXU operands with f32 accumulation -> ~1e-2-scale worst-case error.
    assert jnp.allclose(y, y_ref, atol=2e-2, rtol=2e-2), float(
        jnp.max(jnp.abs(y - y_ref)))

    print("KERNEL_OK")
</pallas_src>

<mosaic_0001>
module attributes {stable_mosaic.version = 11 : i64} {
  func.func @kernel(%arg0: i32, %arg1: memref<8x4x16xf32, #tpu.memory_space<vmem>>, %arg2: memref<16x16xbf16, #tpu.memory_space<vmem>>, %arg3: memref<3x4x8xbf16, #tpu.memory_space<vmem>>, %arg4: memref<1x8xf32, #tpu.memory_space<vmem>>, %arg5: memref<8x16x8xf32, #tpu.memory_space<vmem>>) attributes {dimension_semantics = [#tpu.dimension_semantics<parallel>], iteration_bounds = array<i64: 2>, scalar_prefetch = 0 : i64, scratch_operands = 0 : i64, tpu.core_type = #tpu.core_type<tc>, window_params = [{transform_indices = @transform_0, window_bounds = array<i64: 8, 4, 16>}, {pipeline_mode = #tpu.pipeline_mode<synchronous>, transform_indices = @transform_1, window_bounds = array<i64: 16, 16>}, {pipeline_mode = #tpu.pipeline_mode<synchronous>, transform_indices = @transform_2, window_bounds = array<i64: 3, 4, 8>}, {pipeline_mode = #tpu.pipeline_mode<synchronous>, transform_indices = @transform_3, window_bounds = array<i64: 1, 8>}, {transform_indices = @transform_4, window_bounds = array<i64: 8, 16, 8>}]} {
    %c0 = arith.constant 0 : index
    %c0_0 = arith.constant 0 : index
    %c0_1 = arith.constant 0 : index
    %0 = vector.load %arg1[%c0, %c0_0, %c0_1] : memref<8x4x16xf32, #tpu.memory_space<vmem>>, vector<8x4x16xf32>
    %c0_2 = arith.constant 0 : index
    %c0_3 = arith.constant 0 : index
    %1 = vector.load %arg2[%c0_2, %c0_3] : memref<16x16xbf16, #tpu.memory_space<vmem>>, vector<16x16xbf16>
    %c0_4 = arith.constant 0 : index
    %c0_5 = arith.constant 0 : index
    %2 = vector.load %arg4[%c0_4, %c0_5] : memref<1x8xf32, #tpu.memory_space<vmem>>, vector<1x8xf32>
    %3 = tpu.transpose %0, [0, 2, 1] : vector<8x4x16xf32> -> vector<8x16x4xf32>
    %4 = vector.shape_cast %3 : vector<8x16x4xf32> to vector<128x4xf32>
    %5 = arith.truncf %4 : vector<128x4xf32> to vector<128x4xbf16>
    %c0_6 = arith.constant 0 : index
    %c0_7 = arith.constant 0 : index
    %c0_8 = arith.constant 0 : index
    %6 = vector.load %arg3[%c0_6, %c0_7, %c0_8] : memref<3x4x8xbf16, #tpu.memory_space<vmem>>, vector<1x4x8xbf16>
    %7 = vector.shape_cast %6 : vector<1x4x8xbf16> to vector<4x8xbf16>
    %cst = arith.constant dense<0.000000e+00> : vector<128x8xf32>
    %8 = tpu.matmul %5, %7, %cst {dimension_numbers = #tpu.dot_dimension_numbers<[1], [0], [0], [1], [0, 0, 1, 1], [], []>} : vector<128x4xbf16>, vector<4x8xbf16>, vector<128x8xf32> -> vector<128x8xf32>
    %9 = vector.broadcast %2 : vector<1x8xf32> to vector<128x8xf32>
    %10 = arith.addf %8, %9 : vector<128x8xf32>
    %11 = vector.shape_cast %0 : vector<8x4x16xf32> to vector<32x16xf32>
    %12 = arith.truncf %11 : vector<32x16xf32> to vector<32x16xbf16>
    %cst_9 = arith.constant dense<0.000000e+00> : vector<32x16xf32>
    %13 = tpu.matmul %12, %1, %cst_9 {dimension_numbers = #tpu.dot_dimension_numbers<[1], [0], [0], [1], [0, 0, 1, 1], [], []>} : vector<32x16xbf16>, vector<16x16xbf16>, vector<32x16xf32> -> vector<32x16xf32>
    %14 = vector.shape_cast %13 : vector<32x16xf32> to vector<8x4x16xf32>
    %cst_10 = arith.constant 5.000000e-02 : f32
    %15 = vector.broadcast %cst_10 : f32 to vector<8x4x16xf32>
    %16 = arith.mulf %15, %0 : vector<8x4x16xf32>
    %cst_11 = arith.constant 0.949999988 : f32
    %17 = vector.broadcast %cst_11 : f32 to vector<8x4x16xf32>
    %18 = arith.mulf %17, %14 : vector<8x4x16xf32>
    %19 = arith.addf %16, %18 : vector<8x4x16xf32>
    %20 = tpu.transpose %19, [0, 2, 1] : vector<8x4x16xf32> -> vector<8x16x4xf32>
    %21 = vector.shape_cast %20 : vector<8x16x4xf32> to vector<128x4xf32>
    %22 = arith.truncf %21 : vector<128x4xf32> to vector<128x4xbf16>
    %c1 = arith.constant 1 : index
    %c0_12 = arith.constant 0 : index
    %c0_13 = arith.constant 0 : index
    %23 = vector.load %arg3[%c1, %c0_12, %c0_13] : memref<3x4x8xbf16, #tpu.memory_space<vmem>>, vector<1x4x8xbf16>
    %24 = vector.shape_cast %23 : vector<1x4x8xbf16> to vector<4x8xbf16>
    %cst_14 = arith.constant dense<0.000000e+00> : vector<128x8xf32>
    %25 = tpu.matmul %22, %24, %cst_14 {dimension_numbers = #tpu.dot_dimension_numbers<[1], [0], [0], [1], [0, 0, 1, 1], [], []>} : vector<128x4xbf16>, vector<4x8xbf16>, vector<128x8xf32> -> vector<128x8xf32>
    %26 = arith.addf %10, %25 : vector<128x8xf32>
    %27 = vector.shape_cast %19 : vector<8x4x16xf32> to vector<32x16xf32>
    %28 = arith.truncf %27 : vector<32x16xf32> to vector<32x16xbf16>
    %cst_15 = arith.constant dense<0.000000e+00> : vector<32x16xf32>
    %29 = tpu.matmul %28, %1, %cst_15 {dimension_numbers = #tpu.dot_dimension_numbers<[1], [0], [0], [1], [0, 0, 1, 1], [], []>} : vector<32x16xbf16>, vector<16x16xbf16>, vector<32x16xf32> -> vector<32x16xf32>
    %30 = vector.shape_cast %29 : vector<32x16xf32> to vector<8x4x16xf32>
    %cst_16 = arith.constant 5.000000e-02 : f32
    %31 = vector.broadcast %cst_16 : f32 to vector<8x4x16xf32>
    %32 = arith.mulf %31, %0 : vector<8x4x16xf32>
    %cst_17 = arith.constant 0.949999988 : f32
    %33 = vector.broadcast %cst_17 : f32 to vector<8x4x16xf32>
    %34 = arith.mulf %33, %30 : vector<8x4x16xf32>
    %35 = arith.addf %32, %34 : vector<8x4x16xf32>
    %36 = tpu.transpose %35, [0, 2, 1] : vector<8x4x16xf32> -> vector<8x16x4xf32>
    %37 = vector.shape_cast %36 : vector<8x16x4xf32> to vector<128x4xf32>
    %38 = arith.truncf %37 : vector<128x4xf32> to vector<128x4xbf16>
    %c2 = arith.constant 2 : index
    %c0_18 = arith.constant 0 : index
    %c0_19 = arith.constant 0 : index
    %39 = vector.load %arg3[%c2, %c0_18, %c0_19] : memref<3x4x8xbf16, #tpu.memory_space<vmem>>, vector<1x4x8xbf16>
    %40 = vector.shape_cast %39 : vector<1x4x8xbf16> to vector<4x8xbf16>
    %cst_20 = arith.constant dense<0.000000e+00> : vector<128x8xf32>
    %41 = tpu.matmul %38, %40, %cst_20 {dimension_numbers = #tpu.dot_dimension_numbers<[1], [0], [0], [1], [0, 0, 1, 1], [], []>} : vector<128x4xbf16>, vector<4x8xbf16>, vector<128x8xf32> -> vector<128x8xf32>
    %42 = arith.addf %26, %41 : vector<128x8xf32>
    %43 = vector.shape_cast %42 : vector<128x8xf32> to vector<8x16x8xf32>
    %c0_21 = arith.constant 0 : index
    %c0_22 = arith.constant 0 : index
    %c0_23 = arith.constant 0 : index
    %44 = vector.load %arg5[%c0_21, %c0_22, %c0_23] : memref<8x16x8xf32, #tpu.memory_space<vmem>>, vector<8x16x8xf32>
    tpu.vector_store %arg5[%c0_21, %c0_22, %c0_23], %43 {strides = array<i32>} : memref<8x16x8xf32, #tpu.memory_space<vmem>>, vector<8x16x8xf32>,
    return
  }
  func.func @transform_0(%arg0: i32) -> (i32, i32, i32) {
    %c0_i32 = arith.constant 0 : i32
    %c0_i32_0 = arith.constant 0 : i32
    %c0_i32_1 = arith.constant 0 : i32
    return %arg0, %c0_i32, %c0_i32_0 : i32, i32, i32
  }
  func.func @transform_1(%arg0: i32) -> (i32, i32) {
    %c0_i32 = arith.constant 0 : i32
    %c0_i32_0 = arith.constant 0 : i32
    %c0_i32_1 = arith.constant 0 : i32
    return %c0_i32, %c0_i32_0 : i32, i32
  }
  func.func @transform_2(%arg0: i32) -> (i32, i32, i32) {
    %c0_i32 = arith.constant 0 : i32
    %c0_i32_0 = arith.constant 0 : i32
    %c0_i32_1 = arith.constant 0 : i32
    %c0_i32_2 = arith.constant 0 : i32
    return %c0_i32, %c0_i32_0, %c0_i32_1 : i32, i32, i32
  }
  func.func @transform_3(%arg0: i32) -> (i32, i32) {
    %c0_i32 = arith.constant 0 : i32
    %c0_i32_0 = arith.constant 0 : i32
    %c0_i32_1 = arith.constant 0 : i32
    return %c0_i32, %c0_i32_0 : i32, i32
  }
  func.func @transform_4(%arg0: i32) -> (i32, i32, i32) {
    %c0_i32 = arith.constant 0 : i32
    %c0_i32_0 = arith.constant 0 : i32
    %c0_i32_1 = arith.constant 0 : i32
    return %arg0, %c0_i32, %c0_i32_0 : i32, i32, i32
  }
}

</mosaic_0001>

<llo_original>
// kernel: tpu_custom_call.1
$region0: #{tpu_custom_call.1}
  #allocation0 [shape = 'u32[]', space=smem, size = 0x4, offset = 0x4, fixed_abs, tag = 'smem constant byte address 0x4 - core index']
  #allocation1 [shape = 'u32[144,128]{1,0:T(1,128)}', space=vmem, size = 0x12000, scoped, tag = 'internal scratch']
  %s0 = inlined_call_operand.hbm [shape: f32[16,4,16], index: 0, kind: input, shape index: {}]
  %s1 = inlined_call_operand.hbm [shape: bf16[16,16], index: 1, kind: input, shape index: {}]
  %s2 = inlined_call_operand.vmem [shape: bf16[3,4,8], index: 2, kind: input, shape index: {}]
  %s3 = inlined_call_operand.vmem [shape: f32[1,8], index: 3, kind: input, shape index: {}]
  %s4 = inlined_call_operand.vmem [shape: f32[16,16,8], index: 4, kind: output, shape index: {}]
  %s5 = sld [smem:[#allocation0]]
  $region57: #{tpu_custom_call.1} parent=0
    _
  %s7 = ssub.s32 1, %s5
  %s8 = scalar_select 0, %s7, %s5
  $region1: #{tpu_custom_call.1} parent=0
    #allocation2 [shape = 'u8[32768]{0}', space=vmem, size = 0x8000, scoped, tag = 'input window, operand 0']
    #allocation3 [shape = 's32[2]{0}', space=sflag, size = 0x8, scoped, tag = 'scoped memory for tpu_custom_call.1']
    #allocation4 [shape = 'u8[4096]{0}', space=vmem, size = 0x1000, scoped, tag = 'input window, operand 1, single buffered']
    #allocation5 [shape = 's32[1]{0}', space=sflag, size = 0x4, scoped, tag = 'scoped memory for tpu_custom_call.1']
    %9 = vsyncpa [#allocation3], 0
    %s10 = scalar_lea.sflag [#allocation3], 1
    %11 = vsyncpa %s10, 0
    %12 = vsyncpa [#allocation5], 0
    loop: start=0, step=1, limit=4
    $region2: #{tpu_custom_call.1} parent=1 // loop_pre_header
      _
    $region3: #{tpu_custom_call.1} parent=1 // loop_header
      %s14 = sphi 0, %s18
      %p15 = scmp.ge.s32.totalorder %s14, 4
      %s24 = sphi 0, %s26
      %s27 = sphi 0, %s24
      %s28 = sphi 0, %s27
      %s44 = sphi 0, %s28
      %s48 = sphi 0, %s48
      %s50 = sphi 0, %s48
      %s51 = sphi 0, %s50
      %s65 = sphi 0, %s51
      %s69 = sphi 0, %s69
      %s71 = sphi 0, %s69
      %s72 = sphi 0, %s71
      %s86 = sphi 0, %s72
      %s90 = sphi 0, %s90
      %s92 = sphi 0, %s90
      %s93 = sphi 0, %s92
      %s107 = sphi 0, %s93
      %s113 = sphi 0, %s115
      %s116 = sphi 0, %s113
      %s117 = sphi 0, %s116
      %s133 = sphi 0, %s117
    $region4: #{tpu_custom_call.1} parent=1 // loop_header_branch
      %17 = sbr.rel (%p15) target = $region8
    $region5: #{tpu_custom_call.1} parent=1 // loop_body
      %s19 = ssub.s32 %s14, 1
      %s20 = ssub.s32 %s14, 2
      %s21 = sadd.s32 %s14, 1
      %s22 = ssub.s32 %s14, %s21
      %p23 = scmp.eq.s32.totalorder %s22, 0
      %s25 = sadd.s32 %s24, 1
      %s26 = scalar_select %p23, %s24, %s25
      %p29 = pneg %p23
      %p30 = scmp.eq.s32.totalorder %s14, 1
      %p31 = por %p29, %p30
      %p32 = scmp.ne.s32.totalorder %s24, %s27
      %p33 = scmp.eq.s32.totalorder %s14, 0
      %p34 = por %p32, %p33
      %p35 = scmp.ne.s32.totalorder %s24, %s27
      %p36 = scmp.eq.s32.totalorder %s19, 1
      %p37 = por %p35, %p36
      %p38 = scmp.ne.s32.totalorder %s27, %s28
      %p39 = scmp.eq.s32.totalorder %s19, 0
      %p40 = por %p38, %p39
      %p41 = scmp.ne.s32.totalorder %s27, %s28
      %p42 = scmp.eq.s32.totalorder %s20, 1
      %p43 = por %p41, %p42
      %p45 = scmp.ne.s32.totalorder %s28, %s44
      %p46 = scmp.eq.s32.totalorder %s20, 0
      %p47 = por %p45, %p46
      %s49 = sadd.s32 %s48, 1
      %p52 = scmp.eq.s32.totalorder %s14, 1
      %p53 = scmp.ne.s32.totalorder %s48, %s50
      %p54 = scmp.eq.s32.totalorder %s14, 0
      %p55 = por %p53, %p54
      %p56 = scmp.ne.s32.totalorder %s48, %s50
      %p57 = scmp.eq.s32.totalorder %s19, 1
      %p58 = por %p56, %p57
      %p59 = scmp.ne.s32.totalorder %s50, %s51
      %p60 = scmp.eq.s32.totalorder %s19, 0
      %p61 = por %p59, %p60
      %p62 = scmp.ne.s32.totalorder %s50, %s51
      %p63 = scmp.eq.s32.totalorder %s20, 1
      %p64 = por %p62, %p63
      %p66 = scmp.ne.s32.totalorder %s51, %s65
      %p67 = scmp.eq.s32.totalorder %s20, 0
      %p68 = por %p66, %p67
      %s70 = sadd.s32 %s69, 1
      %p73 = scmp.eq.s32.totalorder %s14, 1
      %p74 = scmp.ne.s32.totalorder %s69, %s71
      %p75 = scmp.eq.s32.totalorder %s14, 0
      %p76 = por %p74, %p75
      %p77 = scmp.ne.s32.totalorder %s69, %s71
      %p78 = scmp.eq.s32.totalorder %s19, 1
      %p79 = por %p77, %p78
      %p80 = scmp.ne.s32.totalorder %s71, %s72
      %p81 = scmp.eq.s32.totalorder %s19, 0
      %p82 = por %p80, %p81
      %p83 = scmp.ne.s32.totalorder %s71, %s72
      %p84 = scmp.eq.s32.totalorder %s20, 1
      %p85 = por %p83, %p84
      %p87 = scmp.ne.s32.totalorder %s72, %s86
      %p88 = scmp.eq.s32.totalorder %s20, 0
      %p89 = por %p87, %p88
      %s91 = sadd.s32 %s90, 1
      %p94 = scmp.eq.s32.totalorder %s14, 1
      %p95 = scmp.ne.s32.totalorder %s90, %s92
      %p96 = scmp.eq.s32.totalorder %s14, 0
      %p97 = por %p95, %p96
      %p98 = scmp.ne.s32.totalorder %s90, %s92
      %p99 = scmp.eq.s32.totalorder %s19, 1
      %p100 = por %p98, %p99
      %p101 = scmp.ne.s32.totalorder %s92, %s93
      %p102 = scmp.eq.s32.totalorder %s19, 0
      %p103 = por %p101, %p102
      %p104 = scmp.ne.s32.totalorder %s92, %s93
      %p105 = scmp.eq.s32.totalorder %s20, 1
      %p106 = por %p104, %p105
      %p108 = scmp.ne.s32.totalorder %s93, %s107
      %p109 = scmp.eq.s32.totalorder %s20, 0
      %p110 = por %p108, %p109
      %s111 = ssub.s32 %s14, %s21
      %p112 = scmp.eq.s32.totalorder %s111, 0
      %s114 = sadd.s32 %s113, 1
      %s115 = scalar_select %p112, %s113, %s114
      %p118 = pneg %p112
      %p119 = scmp.eq.s32.totalorder %s14, 1
      %p120 = por %p118, %p119
      %p121 = scmp.ne.s32.totalorder %s113, %s116
      %p122 = scmp.eq.s32.totalorder %s14, 0
      %p123 = por %p121, %p122
      %p124 = scmp.ne.s32.totalorder %s113, %s116
      %p125 = scmp.eq.s32.totalorder %s19, 1
      %p126 = por %p124, %p125
      %p127 = scmp.ne.s32.totalorder %s116, %s117
      %p128 = scmp.eq.s32.totalorder %s19, 0
      %p129 = por %p127, %p128
      %p130 = scmp.ne.s32.totalorder %s116, %s117
      %p131 = scmp.eq.s32.totalorder %s20, 1
      %p132 = por %p130, %p131
      %p134 = scmp.ne.s32.totalorder %s117, %s133
      %p135 = scmp.eq.s32.totalorder %s20, 0
      %p136 = por %p134, %p135
      %p137 = scmp.le.s32.totalorder 1, %s14
      %p138 = scmp.lt.s32.totalorder %s14, 3
      %p139 = pnand %p137, %p138
      %p140 = pneg %p139
      // Predicated region
      $region9: #{tpu_custom_call.1} parent=5 // pred_check
        _
      $region10: #{tpu_custom_call.1} parent=5 // pred_check_branch
        %142 = sbr.rel (%p139) target = $region12
      $region11: #{tpu_custom_call.1} parent=5 // pred_region
        %s143 = ssub.s32 %s14, 1
        // Predicated region
        $region13: #{tpu_custom_call.1} parent=11 // pred_check
          %p144 = pneg %p61
        $region14: #{tpu_custom_call.1} parent=11 // pred_check_branch
          %146 = sbr.rel (%p144) target = $region16
        $region15: #{tpu_custom_call.1} parent=11 // pred_region
          %s148 = ssub.s32 128, 128
          %149 = vsyncadd [#allocation5], %s148
          %s150 = sshll.u32 [#allocation4], 4
          %s151 = int_to_ptr.vmem [resolvable:$true] %s150
          %156 = dma.hbm_to_vmem [thread:$0]  %s1, 128, %s151, [#allocation5], 64, 64, 4
        $region16: #{tpu_custom_call.1} parent=11 // pred_fallthru
          _
        // Predicated region
        $region17: #{tpu_custom_call.1} parent=11 // pred_check
          %p157 = pneg %p82
        $region18: #{tpu_custom_call.1} parent=11 // pred_check_branch
          %159 = sbr.rel (%p157) target = $region20
        $region19: #{tpu_custom_call.1} parent=11 // pred_region
          _
        $region20: #{tpu_custom_call.1} parent=11 // pred_fallthru
          _
        // Predicated region
        $region21: #{tpu_custom_call.1} parent=11 // pred_check
          %p160 = pneg %p103
        $region22: #{tpu_custom_call.1} parent=11 // pred_check_branch
          %162 = sbr.rel (%p160) target = $region24
        $region23: #{tpu_custom_call.1} parent=11 // pred_region
          _
        $region24: #{tpu_custom_call.1} parent=11 // pred_fallthru
          _
      $region12: #{tpu_custom_call.1} parent=5 // pred_fallthru
        _
      %p163 = scmp.lt.s32.totalorder %s14, 2
      // Predicated region
      $region25: #{tpu_custom_call.1} parent=5 // pred_check
        %p164 = pneg %p163
      $region26: #{tpu_custom_call.1} parent=5 // pred_check_branch
        %166 = sbr.rel (%p164) target = $region28
      $region27: #{tpu_custom_call.1} parent=5 // pred_region
        // Predicated region
        $region29: #{tpu_custom_call.1} parent=27 // pred_check
          %p167 = pneg %p34
        $region30: #{tpu_custom_call.1} parent=27 // pred_check_branch
          %169 = sbr.rel (%p167) target = $region32
        $region31: #{tpu_custom_call.1} parent=27 // pred_region
          %s170 = sand.u32 %s24, 1
          %s171 = scalar_lea.sflag [#allocation3], %s170
          %s172 = sand.u32 %s24, 1
          %s173 = smul.addr %s172, 32
          %s174 = scalar_lea.vmem [#allocation2], %s173
          %s175 = smul.u32 8, %s14
          %s177 = ssub.s32 512, 512
          %178 = vsyncadd %s171, %s177
          %s179 = smul.addr %s175, 64
          %s180 = scalar_lea.hbm %s0, %s179
          %s181 = sshll.u32 %s174, 4
          %s182 = int_to_ptr.vmem [resolvable:$true] %s181
          %187 = dma.hbm_to_vmem [thread:$0]  %s180, 512, %s182, %s171, 64, 64, 4
        $region32: #{tpu_custom_call.1} parent=27 // pred_fallthru
          _
      $region28: #{tpu_custom_call.1} parent=5 // pred_fallthru
        _
      %p188 = scmp.le.s32.totalorder 1, %s14
      %p189 = scmp.lt.s32.totalorder %s14, 3
      %p190 = pnand %p188, %p189
      %p191 = pneg %p190
      // Predicated region
      $region33: #{tpu_custom_call.1} parent=5 // pred_check
        _
      $region34: #{tpu_custom_call.1} parent=5 // pred_check_branch
        %193 = sbr.rel (%p190) target = $region36
      $region35: #{tpu_custom_call.1} parent=5 // pred_region
        %s194 = ssub.s32 %s14, 1
        %s195 = sand.u32 %s27, 1
        %s196 = scalar_lea.sflag [#allocation3], %s195
        %s197 = sand.u32 %s27, 1
        %s198 = smul.addr %s197, 32
        %s199 = scalar_lea.vmem [#allocation2], %s198
        // Predicated region
        $region37: #{tpu_custom_call.1} parent=35 // pred_check
          %p200 = pneg %p40
        $region38: #{tpu_custom_call.1} parent=35 // pred_check_branch
          %202 = sbr.rel (%p200) target = $region40
        $region39: #{tpu_custom_call.1} parent=35 // pred_region
          %203 = dma.done %s196, 512
        $region40: #{tpu_custom_call.1} parent=35 // pred_fallthru
          _
        // Predicated region
        $region41: #{tpu_custom_call.1} parent=35 // pred_check
          %p204 = pneg %p61
        $region42: #{tpu_custom_call.1} parent=35 // pred_check_branch
          %206 = sbr.rel (%p204) target = $region44
        $region43: #{tpu_custom_call.1} parent=35 // pred_region
          %207 = dma.done [#allocation5], 128
        $region44: #{tpu_custom_call.1} parent=35 // pred_fallthru
          _
        %s208 = sand.u32 %s27, 1
        %s209 = scalar_lea.sflag [#allocation3], %s208
        %s210 = sand.u32 %s27, 1
        %s211 = smul.addr %s210, 32
        %s212 = scalar_lea.vmem [#allocation2], %s211
        %p213 = pneg %p40
        %p214 = pneg %p37
        %p215 = pneg %p61
        %p216 = pneg %p58
        %p217 = pneg %p82
        %p218 = pneg %p79
        %p219 = pneg %p103
        %p220 = pneg %p100
        %p221 = pneg %p129
        %p222 = pneg %p126
        %s223 = smul.u32 8, %s19
        %p224 = scmp.lt.s32.totalorder %s223, 15
        %s225 = scalar_select %p224, %s223, 15
        %s226 = smul.addr %s225, 2
        %s227 = smul.addr %s226, 8
        %s228 = scalar_lea.vmem %s4, %s227
        %s229 = smul.u32 8, %s19
        %s230 = smul.u32 8, %s19
        %p231 = scmp.lt.s32.totalorder %s230, 15
        %s232 = scalar_select %p231, %s230, 15
        %s233 = smul.addr %s232, 2
        %s234 = smul.addr %s233, 8
        %s235 = scalar_lea.vmem %s4, %s234
        %s236 = smul.u32 8, %s19
        %v238 = vld [vmem:[%s199] sm:$0xf]
        %v239 = vld [vmem:[%s199 + $0x4] sm:$0xf]
        %v240 = vld [vmem:[%s199 + $0x8] sm:$0xf]
        %v241 = vld [vmem:[%s199 + $0xc] sm:$0xf]
        %v242 = vld [vmem:[%s199 + $0x10] sm:$0xf]
        %v243 = vld [vmem:[%s199 + $0x14] sm:$0xf]
        %v244 = vld [vmem:[%s199 + $0x18] sm:$0xf]
        %v245 = vld [vmem:[%s199 + $0x1c] sm:$0xf]
        %v246 = vld [vmem:[#allocation4] sm:$0xf]
        %v247 = vld [vmem:[#allocation4 + $0x4] sm:$0xf]
        %v248 = vld [vmem:[%s3] sm:$0x1]
        %249 = vxpose.xlu0.b32.start [1/16] %v238, 128
        %250 = vxpose.xlu0.b32.cont [2/16] 0.0, 128
        %251 = vxpose.xlu0.b32.cont [3/16] 0.0, 128
        %252 = vxpose.xlu0.b32.cont [4/16] 0.0, 128
        %253 = vxpose.xlu0.b32.cont [5/16] 0.0, 128
        %254 = vxpose.xlu0.b32.cont [6/16] 0.0, 128
        %255 = vxpose.xlu0.b32.cont [7/16] 0.0, 128
        %256 = vxpose.xlu0.b32.cont [8/16] 0.0, 128
        %257 = vxpose.xlu0.b32.cont [9/16] 0.0, 128
        %258 = vxpose.xlu0.b32.cont [10/16] 0.0, 128
        %259 = vxpose.xlu0.b32.cont [11/16] 0.0, 128
        %260 = vxpose.xlu0.b32.cont [12/16] 0.0, 128
        %261 = vxpose.xlu0.b32.cont [13/16] 0.0, 128
        %262 = vxpose.xlu0.b32.cont [14/16] 0.0, 128
        %263 = vxpose.xlu0.b32.cont [15/16] 0.0, 128
        %264 = vxpose.xlu0.b32.end [16/16] 0.0, 128
        %v265 = vpop.trf.xlu0
        %v266 = vpop.trf.xlu0
        %v267 = vpop.trf.xlu0
        %v268 = vpop.trf.xlu0
        %v269 = vpop.trf.xlu0
        %v270 = vpop.trf.xlu0
        %v271 = vpop.trf.xlu0
        %v272 = vpop.trf.xlu0
        %v273 = vpop.trf.xlu0
        %v274 = vpop.trf.xlu0
        %v275 = vpop.trf.xlu0
        %v276 = vpop.trf.xlu0
        %v277 = vpop.trf.xlu0
        %v278 = vpop.trf.xlu0
        %v279 = vpop.trf.xlu0
        %v280 = vpop.trf.xlu0
        %281 = vxpose.xlu0.b32.start [1/16] %v239, 128
        %282 = vxpose.xlu0.b32.cont [2/16] 0.0, 128
        %283 = vxpose.xlu0.b32.cont [3/16] 0.0, 128
        %284 = vxpose.xlu0.b32.cont [4/16] 0.0, 128
        %285 = vxpose.xlu0.b32.cont [5/16] 0.0, 128
        %286 = vxpose.xlu0.b32.cont [6/16] 0.0, 128
        %287 = vxpose.xlu0.b32.cont [7/16] 0.0, 128
        %288 = vxpose.xlu0.b32.cont [8/16] 0.0, 128
        %289 = vxpose.xlu0.b32.cont [9/16] 0.0, 128
        %290 = vxpose.xlu0.b32.cont [10/16] 0.0, 128
        %291 = vxpose.xlu0.b32.cont [11/16] 0.0, 128
        %292 = vxpose.xlu0.b32.cont [12/16] 0.0, 128
        %293 = vxpose.xlu0.b32.cont [13/16] 0.0, 128
        %294 = vxpose.xlu0.b32.cont [14/16] 0.0, 128
        %295 = vxpose.xlu0.b32.cont [15/16] 0.0, 128
        %296 = vxpose.xlu0.b32.end [16/16] 0.0, 128
        %v297 = vpop.trf.xlu0
        %v298 = vpop.trf.xlu0
        %v299 = vpop.trf.xlu0
        %v300 = vpop.trf.xlu0
        %v301 = vpop.trf.xlu0
        %v302 = vpop.trf.xlu0
        %v303 = vpop.trf.xlu0
        %v304 = vpop.trf.xlu0
        %v305 = vpop.trf.xlu0
        %v306 = vpop.trf.xlu0
        %v307 = vpop.trf.xlu0
        %v308 = vpop.trf.xlu0
        %v309 = vpop.trf.xlu0
        %v310 = vpop.trf.xlu0
        %v311 = vpop.trf.xlu0
        %v312 = vpop.trf.xlu0
        %313 = vxpose.xlu0.b32.start [1/16] %v240, 128
        %314 = vxpose.xlu0.b32.cont [2/16] 0.0, 128
        %315 = vxpose.xlu0.b32.cont [3/16] 0.0, 128
        %316 = vxpose.xlu0.b32.cont [4/16] 0.0, 128
        %317 = vxpose.xlu0.b32.cont [5/16] 0.0, 128
        %318 = vxpose.xlu0.b32.cont [6/16] 0.0, 128
        %319 = vxpose.xlu0.b32.cont [7/16] 0.0, 128
        %320 = vxpose.xlu0.b32.cont [8/16] 0.0, 128
        %321 = vxpose.xlu0.b32.cont [9/16] 0.0, 128
        %322 = vxpose.xlu0.b32.cont [10/16] 0.0, 128
        %323 = vxpose.xlu0.b32.cont [11/16] 0.0, 128
        %324 = vxpose.xlu0.b32.cont [12/16] 0.0, 128
        %325 = vxpose.xlu0.b32.cont [13/16] 0.0, 128
        %326 = vxpose.xlu0.b32.cont [14/16] 0.0, 128
        %327 = vxpose.xlu0.b32.cont [15/16] 0.0, 128
        %328 = vxpose.xlu0.b32.end [16/16] 0.0, 128
        %v329 = vpop.trf.xlu0
        %v330 = vpop.trf.xlu0
        %v331 = vpop.trf.xlu0
        %v332 = vpop.trf.xlu0
        %v333 = vpop.trf.xlu0
        %v334 = vpop.trf.xlu0
        %v335 = vpop.trf.xlu0
        %v336 = vpop.trf.xlu0
        %v337 = vpop.trf.xlu0
        %v338 = vpop.trf.xlu0
        %v339 = vpop.trf.xlu0
        %v340 = vpop.trf.xlu0
        %v341 = vpop.trf.xlu0
        %v342 = vpop.trf.xlu0
        %v343 = vpop.trf.xlu0
        %v344 = vpop.trf.xlu0
        %345 = vxpose.xlu0.b32.start [1/16] %v241, 128
        %346 = vxpose.xlu0.b32.cont [2/16] 0.0, 128
        %347 = vxpose.xlu0.b32.cont [3/16] 0.0, 128
        %348 = vxpose.xlu0.b32.cont [4/16] 0.0, 128
        %349 = vxpose.xlu0.b32.cont [5/16] 0.0, 128
        %350 = vxpose.xlu0.b32.cont [6/16] 0.0, 128
        %351 = vxpose.xlu0.b32.cont [7/16] 0.0, 128
        %352 = vxpose.xlu0.b32.cont [8/16] 0.0, 128
        %353 = vxpose.xlu0.b32.cont [9/16] 0.0, 128
        %354 = vxpose.xlu0.b32.cont [10/16] 0.0, 128
        %355 = vxpose.xlu0.b32.cont [11/16] 0.0, 128
        %356 = vxpose.xlu0.b32.cont [12/16] 0.0, 128
        %357 = vxpose.xlu0.b32.cont [13/16] 0.0, 128
        %358 = vxpose.xlu0.b32.cont [14/16] 0.0, 128
        %359 = vxpose.xlu0.b32.cont [15/16] 0.0, 128
        %360 = vxpose.xlu0.b32.end [16/16] 0.0, 128
        %v361 = vpop.trf.xlu0
        %v362 = vpop.trf.xlu0
        %v363 = vpop.trf.xlu0
        %v364 = vpop.trf.xlu0
        %v365 = vpop.trf.xlu0
        %v366 = vpop.trf.xlu0
        %v367 = vpop.trf.xlu0
        %v368 = vpop.trf.xlu0
        %v369 = vpop.trf.xlu0
        %v370 = vpop.trf.xlu0
        %v371 = vpop.trf.xlu0
        %v372 = vpop.trf.xlu0
        %v373 = vpop.trf.xlu0
        %v374 = vpop.trf.xlu0
        %v375 = vpop.trf.xlu0
        %v376 = vpop.trf.xlu0
        %377 = vxpose.xlu0.b32.start [1/16] %v242, 128
        %378 = vxpose.xlu0.b32.cont [2/16] 0.0, 128
        %379 = vxpose.xlu0.b32.cont [3/16] 0.0, 128
        %380 = vxpose.xlu0.b32.cont [4/16] 0.0, 128
        %381 = vxpose.xlu0.b32.cont [5/16] 0.0, 128
        %382 = vxpose.xlu0.b32.cont [6/16] 0.0, 128
        %383 = vxpose.xlu0.b32.cont [7/16] 0.0, 128
        %384 = vxpose.xlu0.b32.cont [8/16] 0.0, 128
        %385 = vxpose.xlu0.b32.cont [9/16] 0.0, 128
        %386 = vxpose.xlu0.b32.cont [10/16] 0.0, 128
        %387 = vxpose.xlu0.b32.cont [11/16] 0.0, 128
        %388 = vxpose.xlu0.b32.cont [12/16] 0.0, 128
        %389 = vxpose.xlu0.b32.cont [13/16] 0.0, 128
        %390 = vxpose.xlu0.b32.cont [14/16] 0.0, 128
        %391 = vxpose.xlu0.b32.cont [15/16] 0.0, 128
        %392 = vxpose.xlu0.b32.end [16/16] 0.0, 128
        %v393 = vpop.trf.xlu0
        %v394 = vpop.trf.xlu0
        %v395 = vpop.trf.xlu0
        %v396 = vpop.trf.xlu0
        %v397 = vpop.trf.xlu0
        %v398 = vpop.trf.xlu0
        %v399 = vpop.trf.xlu0
        %v400 = vpop.trf.xlu0
        %v401 = vpop.trf.xlu0
        %v402 = vpop.trf.xlu0
        %v403 = vpop.trf.xlu0
        %v404 = vpop.trf.xlu0
        %v405 = vpop.trf.xlu0
        %v406 = vpop.trf.xlu0
        %v407 = vpop.trf.xlu0
        %v408 = vpop.trf.xlu0
        %409 = vxpose.xlu0.b32.start [1/16] %v243, 128
        %410 = vxpose.xlu0.b32.cont [2/16] 0.0, 128
        %411 = vxpose.xlu0.b32.cont [3/16] 0.0, 128
        %412 = vxpose.xlu0.b32.cont [4/16] 0.0, 128
        %413 = vxpose.xlu0.b32.cont [5/16] 0.0, 128
        %414 = vxpose.xlu0.b32.cont [6/16] 0.0, 128
        %415 = vxpose.xlu0.b32.cont [7/16] 0.0, 128
        %416 = vxpose.xlu0.b32.cont [8/16] 0.0, 128
        %417 = vxpose.xlu0.b32.cont [9/16] 0.0, 128
        %418 = vxpose.xlu0.b32.cont [10/16] 0.0, 128
        %419 = vxpose.xlu0.b32.cont [11/16] 0.0, 128
        %420 = vxpose.xlu0.b32.cont [12/16] 0.0, 128
        %421 = vxpose.xlu0.b32.cont [13/16] 0.0, 128
        %422 = vxpose.xlu0.b32.cont [14/16] 0.0, 128
        %423 = vxpose.xlu0.b32.cont [15/16] 0.0, 128
        %424 = vxpose.xlu0.b32.end [16/16] 0.0, 128
        %v425 = vpop.trf.xlu0
        %v426 = vpop.trf.xlu0
        %v427 = vpop.trf.xlu0
        %v428 = vpop.trf.xlu0
        %v429 = vpop.trf.xlu0
        %v430 = vpop.trf.xlu0
        %v431 = vpop.trf.xlu0
        %v432 = vpop.trf.xlu0
        %v433 = vpop.trf.xlu0
        %v434 = vpop.trf.xlu0
        %v435 = vpop.trf.xlu0
        %v436 = vpop.trf.xlu0
        %v437 = vpop.trf.xlu0
        %v438 = vpop.trf.xlu0
        %v439 = vpop.trf.xlu0
        %v440 = vpop.trf.xlu0
        %441 = vxpose.xlu0.b32.start [1/16] %v244, 128
        %442 = vxpose.xlu0.b32.cont [2/16] 0.0, 128
        %443 = vxpose.xlu0.b32.cont [3/16] 0.0, 128
        %444 = vxpose.xlu0.b32.cont [4/16] 0.0, 128
        %445 = vxpose.xlu0.b32.cont [5/16] 0.0, 128
        %446 = vxpose.xlu0.b32.cont [6/16] 0.0, 128
        %447 = vxpose.xlu0.b32.cont [7/16] 0.0, 128
        %448 = vxpose.xlu0.b32.cont [8/16] 0.0, 128
        %449 = vxpose.xlu0.b32.cont [9/16] 0.0, 128
        %450 = vxpose.xlu0.b32.cont [10/16] 0.0, 128
        %451 = vxpose.xlu0.b32.cont [11/16] 0.0, 128
        %452 = vxpose.xlu0.b32.cont [12/16] 0.0, 128
        %453 = vxpose.xlu0.b32.cont [13/16] 0.0, 128
        %454 = vxpose.xlu0.b32.cont [14/16] 0.0, 128
        %455 = vxpose.xlu0.b32.cont [15/16] 0.0, 128
        %456 = vxpose.xlu0.b32.end [16/16] 0.0, 128
        %v457 = vpop.trf.xlu0
        %v458 = vpop.trf.xlu0
        %v459 = vpop.trf.xlu0
        %v460 = vpop.trf.xlu0
        %v461 = vpop.trf.xlu0
        %v462 = vpop.trf.xlu0
        %v463 = vpop.trf.xlu0
        %v464 = vpop.trf.xlu0
        %v465 = vpop.trf.xlu0
        %v466 = vpop.trf.xlu0
        %v467 = vpop.trf.xlu0
        %v468 = vpop.trf.xlu0
        %v469 = vpop.trf.xlu0
        %v470 = vpop.trf.xlu0
        %v471 = vpop.trf.xlu0
        %v472 = vpop.trf.xlu0
        %473 = vxpose.xlu0.b32.start [1/16] %v245, 128
        %474 = vxpose.xlu0.b32.cont [2/16] 0.0, 128
        %475 = vxpose.xlu0.b32.cont [3/16] 0.0, 128
        %476 = vxpose.xlu0.b32.cont [4/16] 0.0, 128
        %477 = vxpose.xlu0.b32.cont [5/16] 0.0, 128
        %478 = vxpose.xlu0.b32.cont [6/16] 0.0, 128
        %479 = vxpose.xlu0.b32.cont [7/16] 0.0, 128
        %480 = vxpose.xlu0.b32.cont [8/16] 0.0, 128
        %481 = vxpose.xlu0.b32.cont [9/16] 0.0, 128
        %482 = vxpose.xlu0.b32.cont [10/16] 0.0, 128
        %483 = vxpose.xlu0.b32.cont [11/16] 0.0, 128
        %484 = vxpose.xlu0.b32.cont [12/16] 0.0, 128
        %485 = vxpose.xlu0.b32.cont [13/16] 0.0, 128
        %486 = vxpose.xlu0.b32.cont [14/16] 0.0, 128
        %487 = vxpose.xlu0.b32.cont [15/16] 0.0, 128
        %488 = vxpose.xlu0.b32.end [16/16] 0.0, 128
        %v489 = vpop.trf.xlu0
        %v490 = vpop.trf.xlu0
        %v491 = vpop.trf.xlu0
        %v492 = vpop.trf.xlu0
        %v493 = vpop.trf.xlu0
        %v494 = vpop.trf.xlu0
        %v495 = vpop.trf.xlu0
        %v496 = vpop.trf.xlu0
        %v497 = vpop.trf.xlu0
        %v498 = vpop.trf.xlu0
        %v499 = vpop.trf.xlu0
        %v500 = vpop.trf.xlu0
        %v501 = vpop.trf.xlu0
        %v502 = vpop.trf.xlu0
        %v503 = vpop.trf.xlu0
        %v504 = vpop.trf.xlu0
        %v505 = vpack.c.bf16 %v266, %v265
        %v506 = vpack.c.bf16 %v298, %v297
        %v507 = vpack.c.bf16 %v330, %v329
        %v508 = vpack.c.bf16 %v362, %v361
        %v509 = vpack.c.bf16 %v394, %v393
        %v510 = vpack.c.bf16 %v426, %v425
        %v511 = vpack.c.bf16 %v458, %v457
        %v512 = vpack.c.bf16 %v490, %v489
        %v513 = vld [vmem:[%s2] sm:$0x3]
        %v515 = vlaneseq
        %v516 = vshrl.u32 %v515, 7
        %v517 = vsub.s32 0, %v516
        %v518 = vrot.slane %v248, %v517
        %vm520 = vcmask 31744
        %v522 = vsel %vm520, %v505, 0
        %v525 = vsel %vm520, %v506, 0
        %v528 = vsel %vm520, %v507, 0
        %v531 = vsel %vm520, %v508, 0
        %v534 = vsel %vm520, %v509, 0
        %v537 = vsel %vm520, %v510, 0
        %v540 = vsel %vm520, %v511, 0
        %v543 = vsel %vm520, %v512, 0
        %vm545 = vcmask 1041408
        %v547 = vsel %vm545, %v513, 0
        %549 = vmatprep.subr.bf16.mxu0 0
        %550 = vmatpush1.bf16.msra.mxu0 %v547
        %551 = vmatprep.subr.bf16.mxu0 0
        %552 = vmatpush1.bf16.msra.mxu0 0
        %553 = vmatprep.subr.bf16.mxu0 0
        %554 = vmatpush1.bf16.msra.mxu0 0
        %555 = vmatprep.subr.bf16.mxu0 0
        %556 = vmatpush1.bf16.msra.mxu0 0
        %557 = vmatprep.subr.bf16.mxu0 0
        %558 = vmatpush1.bf16.msra.mxu0 0
        %559 = vmatprep.subr.bf16.mxu0 0
        %560 = vmatpush1.bf16.msra.mxu0 0
        %561 = vmatprep.subr.bf16.mxu0 0
        %562 = vmatpush1.bf16.msra.mxu0 0
        %563 = vmatprep.subr.bf16.mxu0 0
        %564 = vmatpush1.bf16.msra.mxu0 0
        %565 = vmatprep.subr.bf16.mxu0 0
        %566 = vmatpush1.bf16.msra.mxu0 0
        %567 = vmatprep.subr.bf16.mxu0 0
        %568 = vmatpush1.bf16.msra.mxu0 0
        %569 = vmatprep.subr.bf16.mxu0 0
        %570 = vmatpush1.bf16.msra.mxu0 0
        %571 = vmatprep.subr.bf16.mxu0 0
        %572 = vmatpush1.bf16.msra.mxu0 0
        %573 = vmatprep.subr.bf16.mxu0 0
        %574 = vmatpush1.bf16.msra.mxu0 0
        %575 = vmatprep.subr.bf16.mxu0 0
        %576 = vmatpush1.bf16.msra.mxu0 0
        %577 = vmatprep.subr.bf16.mxu0 0
        %578 = vmatpush1.bf16.msra.mxu0 0
        %579 = vmatprep.subr.bf16.mxu0 0
        %580 = vmatpush1.bf16.msra.mxu0 0
        %581 = vmatprep.mubr.bf16.mxu0 0
        %582 = vmatmul.mubr.bf16.gmra.mrb[0].mxu0 %v522
        %v583 = vpop.f32.mrb[0].mxu0
        %v584 = vadd.f32 %v518, %v583
        %v585 = vpop.f32.mrb[0].mxu0
        %v586 = vpop.f32.mrb[0].mxu0
        %v587 = vadd.f32 %v518, %v586
        %v588 = vpop.f32.mrb[0].mxu0
        %589 = vmatprep.mubr.bf16.mxu0 0
        %590 = vmatmul.mubr.bf16.gmra.mrb[0].mxu0 %v525
        %v591 = vpop.f32.mrb[0].mxu0
        %v592 = vadd.f32 %v518, %v591
        %v593 = vpop.f32.mrb[0].mxu0
        %v594 = vpop.f32.mrb[0].mxu0
        %v595 = vadd.f32 %v518, %v594
        %v596 = vpop.f32.mrb[0].mxu0
        %597 = vmatprep.mubr.bf16.mxu0 0
        %598 = vmatmul.mubr.bf16.gmra.mrb[0].mxu0 %v528
        %v599 = vpop.f32.mrb[0].mxu0
        %v600 = vadd.f32 %v518, %v599
        %v601 = vpop.f32.mrb[0].mxu0
        %v602 = vpop.f32.mrb[0].mxu0
        %v603 = vadd.f32 %v518, %v602
        %v604 = vpop.f32.mrb[0].mxu0
        %605 = vmatprep.mubr.bf16.mxu0 0
        %606 = vmatmul.mubr.bf16.gmra.mrb[0].mxu0 %v531
        %v607 = vpop.f32.mrb[0].mxu0
        %v608 = vadd.f32 %v518, %v607
        %v609 = vpop.f32.mrb[0].mxu0
        %v610 = vpop.f32.mrb[0].mxu0
        %v611 = vadd.f32 %v518, %v610
        %v612 = vpop.f32.mrb[0].mxu0
        %613 = vmatprep.mubr.bf16.mxu0 0
        %614 = vmatmul.mubr.bf16.gmra.mrb[0].mxu0 %v534
        %v615 = vpop.f32.mrb[0].mxu0
        %v616 = vadd.f32 %v518, %v615
        %v617 = vpop.f32.mrb[0].mxu0
        %v618 = vpop.f32.mrb[0].mxu0
        %v619 = vadd.f32 %v518, %v618
        %v620 = vpop.f32.mrb[0].mxu0
        %621 = vmatprep.mubr.bf16.mxu0 0
        %622 = vmatmul.mubr.bf16.gmra.mrb[0].mxu0 %v537
        %v623 = vpop.f32.mrb[0].mxu0
        %v624 = vadd.f32 %v518, %v623
        %v625 = vpop.f32.mrb[0].mxu0
        %v626 = vpop.f32.mrb[0].mxu0
        %v627 = vadd.f32 %v518, %v626
        %v628 = vpop.f32.mrb[0].mxu0
        %629 = vmatprep.mubr.bf16.mxu0 0
        %630 = vmatmul.mubr.bf16.gmra.mrb[0].mxu0 %v540
        %v631 = vpop.f32.mrb[0].mxu0
        %v632 = vadd.f32 %v518, %v631
        %v633 = vpop.f32.mrb[0].mxu0
        %v634 = vpop.f32.mrb[0].mxu0
        %v635 = vadd.f32 %v518, %v634
        %v636 = vpop.f32.mrb[0].mxu0
        %637 = vmatprep.mubr.bf16.mxu0 0
        %638 = vmatmul.mubr.bf16.gmra.mrb[0].mxu0 %v543
        %v639 = vpop.f32.mrb[0].mxu0
        %v640 = vadd.f32 %v518, %v639
        %v641 = vpop.f32.mrb[0].mxu0
        %v642 = vpop.f32.mrb[0].mxu0
        %v643 = vadd.f32 %v518, %v642
        %v644 = vpop.f32.mrb[0].mxu0
        %645 = vdwg.mxu0
        %v654 = vcombine.low %v238, %v239
        %v655 = vcombine.low %v240, %v241
        %v656 = vcombine.low %v242, %v243
        %v657 = vcombine.low %v244, %v245
        %v662 = vpack.c.bf16 %v655, %v654
        %v663 = vpack.c.bf16 %v657, %v656
        %v666 = vunpack.c.l.b16 %v246
        %v667 = vunpack.c.l.b16 %v247
        %v668 = vpack.c.b16 %v667, %v666
        %vm670 = vcmask 130048
        %v672 = vsel %vm670, %v662, 0
        %v675 = vsel %vm670, %v663, 0
        %677 = vmatprep.subr.bf16.mxu0 0
        %678 = vmatpush1.bf16.msra.mxu0 %v668
        %679 = vmatprep.subr.bf16.mxu0 0
        %680 = vmatpush1.bf16.msra.mxu0 0
        %681 = vmatprep.subr.bf16.mxu0 0
        %682 = vmatpush1.bf16.msra.mxu0 0
        %683 = vmatprep.subr.bf16.mxu0 0
        %684 = vmatpush1.bf16.msra.mxu0 0
        %685 = vmatprep.subr.bf16.mxu0 0
        %686 = vmatpush1.bf16.msra.mxu0 0
        %687 = vmatprep.subr.bf16.mxu0 0
        %688 = vmatpush1.bf16.msra.mxu0 0
        %689 = vmatprep.subr.bf16.mxu0 0
        %690 = vmatpush1.bf16.msra.mxu0 0
        %691 = vmatprep.subr.bf16.mxu0 0
        %692 = vmatpush1.bf16.msra.mxu0 0
        %693 = vmatprep.subr.bf16.mxu0 0
        %694 = vmatpush1.bf16.msra.mxu0 0
        %695 = vmatprep.subr.bf16.mxu0 0
        %696 = vmatpush1.bf16.msra.mxu0 0
        %697 = vmatprep.subr.bf16.mxu0 0
        %698 = vmatpush1.bf16.msra.mxu0 0
        %699 = vmatprep.subr.bf16.mxu0 0
        %700 = vmatpush1.bf16.msra.mxu0 0
        %701 = vmatprep.subr.bf16.mxu0 0
        %702 = vmatpush1.bf16.msra.mxu0 0
        %703 = vmatprep.subr.bf16.mxu0 0
        %704 = vmatpush1.bf16.msra.mxu0 0
        %705 = vmatprep.subr.bf16.mxu0 0
        %706 = vmatpush1.bf16.msra.mxu0 0
        %707 = vmatprep.subr.bf16.mxu0 0
        %708 = vmatpush1.bf16.msra.mxu0 0
        %709 = vmatprep.mubr.bf16.mxu0 0
        %710 = vmatmul.mubr.bf16.gmra.mrb[0].mxu0 %v672
        %v711 = vpop.f32.mrb[0].mxu0
        %v712 = vadd.f32 0.0, %v711
        %v713 = vpop.f32.mrb[0].mxu0
        %v714 = vpop.f32.mrb[0].mxu0
        %v715 = vadd.f32 0.0, %v714
        %v716 = vpop.f32.mrb[0].mxu0
        %717 = vmatprep.mubr.bf16.mxu0 0
        %718 = vmatmul.mubr.bf16.gmra.mrb[0].mxu0 %v675
        %v719 = vpop.f32.mrb[0].mxu0
        %v720 = vadd.f32 0.0, %v719
        %v721 = vpop.f32.mrb[0].mxu0
        %v722 = vpop.f32.mrb[0].mxu0
        %v723 = vadd.f32 0.0, %v722
        %v724 = vpop.f32.mrb[0].mxu0
        %725 = vdwg.mxu0
        %v730 = vcombine.high %v712, %v712
        %v731 = vcombine.high %v715, %v715
        %v732 = vcombine.high %v720, %v720
        %v733 = vcombine.high %v723, %v723
        %v738 = vmul.f32 %v238, 0.05
        %v739 = vmul.f32 %v239, 0.05
        %v740 = vmul.f32 %v240, 0.05
        %v741 = vmul.f32 %v241, 0.05
        %v742 = vmul.f32 %v242, 0.05
        %v743 = vmul.f32 %v243, 0.05
        %v744 = vmul.f32 %v244, 0.05
        %v745 = vmul.f32 %v245, 0.05
        %v746 = vmul.f32 %v712, 0.95
        %v747 = vmul.f32 %v730, 0.95
        %v748 = vmul.f32 %v715, 0.95
        %v749 = vmul.f32 %v731, 0.95
        %v750 = vmul.f32 %v720, 0.95
        %v751 = vmul.f32 %v732, 0.95
        %v752 = vmul.f32 %v723, 0.95
        %v753 = vmul.f32 %v733, 0.95
        %v754 = vadd.f32 %v738, %v746
        %v755 = vadd.f32 %v739, %v747
        %v756 = vadd.f32 %v740, %v748
        %v757 = vadd.f32 %v741, %v749
        %v758 = vadd.f32 %v742, %v750
        %v759 = vadd.f32 %v743, %v751
        %v760 = vadd.f32 %v744, %v752
        %v761 = vadd.f32 %v745, %v753
        %762 = vxpose.xlu0.b32.start [1/16] %v754, 128
        %763 = vxpose.xlu0.b32.cont [2/16] 0.0, 128
        %764 = vxpose.xlu0.b32.cont [3/16] 0.0, 128
        %765 = vxpose.xlu0.b32.cont [4/16] 0.0, 128
        %766 = vxpose.xlu0.b32.cont [5/16] 0.0, 128
        %767 = vxpose.xlu0.b32.cont [6/16] 0.0, 128
        %768 = vxpose.xlu0.b32.cont [7/16] 0.0, 128
        %769 = vxpose.xlu0.b32.cont [8/16] 0.0, 128
        %770 = vxpose.xlu0.b32.cont [9/16] 0.0, 128
        %771 = vxpose.xlu0.b32.cont [10/16] 0.0, 128
        %772 = vxpose.xlu0.b32.cont [11/16] 0.0, 128
        %773 = vxpose.xlu0.b32.cont [12/16] 0.0, 128
        %774 = vxpose.xlu0.b32.cont [13/16] 0.0, 128
        %775 = vxpose.xlu0.b32.cont [14/16] 0.0, 128
        %776 = vxpose.xlu0.b32.cont [15/16] 0.0, 128
        %777 = vxpose.xlu0.b32.end [16/16] 0.0, 128
        %v778 = vpop.trf.xlu0
        %v779 = vpop.trf.xlu0
        %v780 = vpop.trf.xlu0
        %v781 = vpop.trf.xlu0
        %v782 = vpop.trf.xlu0
        %v783 = vpop.trf.xlu0
        %v784 = vpop.trf.xlu0
        %v785 = vpop.trf.xlu0
        %v786 = vpop.trf.xlu0
        %v787 = vpop.trf.xlu0
        %v788 = vpop.trf.xlu0
        %v789 = vpop.trf.xlu0
        %v790 = vpop.trf.xlu0
        %v791 = vpop.trf.xlu0
        %v792 = vpop.trf.xlu0
        %v793 = vpop.trf.xlu0
        %794 = vxpose.xlu0.b32.start [1/16] %v755, 128
        %795 = vxpose.xlu0.b32.cont [2/16] 0.0, 128
        %796 = vxpose.xlu0.b32.cont [3/16] 0.0, 128
        %797 = vxpose.xlu0.b32.cont [4/16] 0.0, 128
        %798 = vxpose.xlu0.b32.cont [5/16] 0.0, 128
        %799 = vxpose.xlu0.b32.cont [6/16] 0.0, 128
        %800 = vxpose.xlu0.b32.cont [7/16] 0.0, 128
        %801 = vxpose.xlu0.b32.cont [8/16] 0.0, 128
        %802 = vxpose.xlu0.b32.cont [9/16] 0.0, 128
        %803 = vxpose.xlu0.b32.cont [10/16] 0.0, 128
        %804 = vxpose.xlu0.b32.cont [11/16] 0.0, 128
        %805 = vxpose.xlu0.b32.cont [12/16] 0.0, 128
        %806 = vxpose.xlu0.b32.cont [13/16] 0.0, 128
        %807 = vxpose.xlu0.b32.cont [14/16] 0.0, 128
        %808 = vxpose.xlu0.b32.cont [15/16] 0.0, 128
        %809 = vxpose.xlu0.b32.end [16/16] 0.0, 128
        %v810 = vpop.trf.xlu0
        %v811 = vpop.trf.xlu0
        %v812 = vpop.trf.xlu0
        %v813 = vpop.trf.xlu0
        %v814 = vpop.trf.xlu0
        %v815 = vpop.trf.xlu0
        %v816 = vpop.trf.xlu0
        %v817 = vpop.trf.xlu0
        %v818 = vpop.trf.xlu0
        %v819 = vpop.trf.xlu0
        %v820 = vpop.trf.xlu0
        %v821 = vpop.trf.xlu0
        %v822 = vpop.trf.xlu0
        %v823 = vpop.trf.xlu0
        %v824 = vpop.trf.xlu0
        %v825 = vpop.trf.xlu0
        %826 = vxpose.xlu0.b32.start [1/16] %v756, 128
        %827 = vxpose.xlu0.b32.cont [2/16] 0.0, 128
        %828 = vxpose.xlu0.b32.cont [3/16] 0.0, 128
        %829 = vxpose.xlu0.b32.cont [4/16] 0.0, 128
        %830 = vxpose.xlu0.b32.cont [5/16] 0.0, 128
        %831 = vxpose.xlu0.b32.cont [6/16] 0.0, 128
        %832 = vxpose.xlu0.b32.cont [7/16] 0.0, 128
        %833 = vxpose.xlu0.b32.cont [8/16] 0.0, 128
        %834 = vxpose.xlu0.b32.cont [9/16] 0.0, 128
        %835 = vxpose.xlu0.b32.cont [10/16] 0.0, 128
        %836 = vxpose.xlu0.b32.cont [11/16] 0.0, 128
        %837 = vxpose.xlu0.b32.cont [12/16] 0.0, 128
        %838 = vxpose.xlu0.b32.cont [13/16] 0.0, 128
        %839 = vxpose.xlu0.b32.cont [14/16] 0.0, 128
        %840 = vxpose.xlu0.b32.cont [15/16] 0.0, 128
        %841 = vxpose.xlu0.b32.end [16/16] 0.0, 128
        %v842 = vpop.trf.xlu0
        %v843 = vpop.trf.xlu0
        %v844 = vpop.trf.xlu0
        %v845 = vpop.trf.xlu0
        %v846 = vpop.trf.xlu0
        %v847 = vpop.trf.xlu0
        %v848 = vpop.trf.xlu0
        %v849 = vpop.trf.xlu0
        %v850 = vpop.trf.xlu0
        %v851 = vpop.trf.xlu0
        %v852 = vpop.trf.xlu0
        %v853 = vpop.trf.xlu0
        %v854 = vpop.trf.xlu0
        %v855 = vpop.trf.xlu0
        %v856 = vpop.trf.xlu0
        %v857 = vpop.trf.xlu0
        %858 = vxpose.xlu0.b32.start [1/16] %v757, 128
        %859 = vxpose.xlu0.b32.cont [2/16] 0.0, 128
        %860 = vxpose.xlu0.b32.cont [3/16] 0.0, 128
        %861 = vxpose.xlu0.b32.cont [4/16] 0.0, 128
        %862 = vxpose.xlu0.b32.cont [5/16] 0.0, 128
        %863 = vxpose.xlu0.b32.cont [6/16] 0.0, 128
        %864 = vxpose.xlu0.b32.cont [7/16] 0.0, 128
        %865 = vxpose.xlu0.b32.cont [8/16] 0.0, 128
        %866 = vxpose.xlu0.b32.cont [9/16] 0.0, 128
        %867 = vxpose.xlu0.b32.cont [10/16] 0.0, 128
        %868 = vxpose.xlu0.b32.cont [11/16] 0.0, 128
        %869 = vxpose.xlu0.b32.cont [12/16] 0.0, 128
        %870 = vxpose.xlu0.b32.cont [13/16] 0.0, 128
        %871 = vxpose.xlu0.b32.cont [14/16] 0.0, 128
        %872 = vxpose.xlu0.b32.cont [15/16] 0.0, 128
        %873 = vxpose.xlu0.b32.end [16/16] 0.0, 128
        %v874 = vpop.trf.xlu0
        %v875 = vpop.trf.xlu0
        %v876 = vpop.trf.xlu0
        %v877 = vpop.trf.xlu0
        %v878 = vpop.trf.xlu0
        %v879 = vpop.trf.xlu0
        %v880 = vpop.trf.xlu0
        %v881 = vpop.trf.xlu0
        %v882 = vpop.trf.xlu0
        %v883 = vpop.trf.xlu0
        %v884 = vpop.trf.xlu0
        %v885 = vpop.trf.xlu0
        %v886 = vpop.trf.xlu0
        %v887 = vpop.trf.xlu0
        %v888 = vpop.trf.xlu0
        %v889 = vpop.trf.xlu0
        %890 = vxpose.xlu0.b32.start [1/16] %v758, 128
        %891 = vxpose.xlu0.b32.cont [2/16] 0.0, 128
        %892 = vxpose.xlu0.b32.cont [3/16] 0.0, 128
        %893 = vxpose.xlu0.b32.cont [4/16] 0.0, 128
        %894 = vxpose.xlu0.b32.cont [5/16] 0.0, 128
        %895 = vxpose.xlu0.b32.cont [6/16] 0.0, 128
        %896 = vxpose.xlu0.b32.cont [7/16] 0.0, 128
        %897 = vxpose.xlu0.b32.cont [8/16] 0.0, 128
        %898 = vxpose.xlu0.b32.cont [9/16] 0.0, 128
        %899 = vxpose.xlu0.b32.cont [10/16] 0.0, 128
        %900 = vxpose.xlu0.b32.cont [11/16] 0.0, 128
        %901 = vxpose.xlu0.b32.cont [12/16] 0.0, 128
        %902 = vxpose.xlu0.b32.cont [13/16] 0.0, 128
        %903 = vxpose.xlu0.b32.cont [14/16] 0.0, 128
        %904 = vxpose.xlu0.b32.cont [15/16] 0.0, 128
        %905 = vxpose.xlu0.b32.end [16/16] 0.0, 128
        %v906 = vpop.trf.xlu0
        %v907 = vpop.trf.xlu0
        %v908 = vpop.trf.xlu0
        %v909 = vpop.trf.xlu0
        %v910 = vpop.trf.xlu0
        %v911 = vpop.trf.xlu0
        %v912 = vpop.trf.xlu0
        %v913 = vpop.trf.xlu0
        %v914 = vpop.trf.xlu0
        %v915 = vpop.trf.xlu0
        %v916 = vpop.trf.xlu0
        %v917 = vpop.trf.xlu0
        %v918 = vpop.trf.xlu0
        %v919 = vpop.trf.xlu0
        %v920 = vpop.trf.xlu0
        %v921 = vpop.trf.xlu0
        %922 = vxpose.xlu0.b32.start [1/16] %v759, 128
        %923 = vxpose.xlu0.b32.cont [2/16] 0.0, 128
        %924 = vxpose.xlu0.b32.cont [3/16] 0.0, 128
        %925 = vxpose.xlu0.b32.cont [4/16] 0.0, 128
        %926 = vxpose.xlu0.b32.cont [5/16] 0.0, 128
        %927 = vxpose.xlu0.b32.cont [6/16] 0.0, 128
        %928 = vxpose.xlu0.b32.cont [7/16] 0.0, 128
        %929 = vxpose.xlu0.b32.cont [8/16] 0.0, 128
        %930 = vxpose.xlu0.b32.cont [9/16] 0.0, 128
        %931 = vxpose.xlu0.b32.cont [10/16] 0.0, 128
        %932 = vxpose.xlu0.b32.cont [11/16] 0.0, 128
        %933 = vxpose.xlu0.b32.cont [12/16] 0.0, 128
        %934 = vxpose.xlu0.b32.cont [13/16] 0.0, 128
        %935 = vxpose.xlu0.b32.cont [14/16] 0.0, 128
        %936 = vxpose.xlu0.b32.cont [15/16] 0.0, 128
        %937 = vxpose.xlu0.b32.end [16/16] 0.0, 128
        %v938 = vpop.trf.xlu0
        %v939 = vpop.trf.xlu0
        %v940 = vpop.trf.xlu0
        %v941 = vpop.trf.xlu0
        %v942 = vpop.trf.xlu0
        %v943 = vpop.trf.xlu0
        %v944 = vpop.trf.xlu0
        %v945 = vpop.trf.xlu0
        %v946 = vpop.trf.xlu0
        %v947 = vpop.trf.xlu0
        %v948 = vpop.trf.xlu0
        %v949 = vpop.trf.xlu0
        %v950 = vpop.trf.xlu0
        %v951 = vpop.trf.xlu0
        %v952 = vpop.trf.xlu0
        %v953 = vpop.trf.xlu0
        %954 = vxpose.xlu0.b32.start [1/16] %v760, 128
        %955 = vxpose.xlu0.b32.cont [2/16] 0.0, 128
        %956 = vxpose.xlu0.b32.cont [3/16] 0.0, 128
        %957 = vxpose.xlu0.b32.cont [4/16] 0.0, 128
        %958 = vxpose.xlu0.b32.cont [5/16] 0.0, 128
        %959 = vxpose.xlu0.b32.cont [6/16] 0.0, 128
        %960 = vxpose.xlu0.b32.cont [7/16] 0.0, 128
        %961 = vxpose.xlu0.b32.cont [8/16] 0.0, 128
        %962 = vxpose.xlu0.b32.cont [9/16] 0.0, 128
        %963 = vxpose.xlu0.b32.cont [10/16] 0.0, 128
        %964 = vxpose.xlu0.b32.cont [11/16] 0.0, 128
        %965 = vxpose.xlu0.b32.cont [12/16] 0.0, 128
        %966 = vxpose.xlu0.b32.cont [13/16] 0.0, 128
        %967 = vxpose.xlu0.b32.cont [14/16] 0.0, 128
        %968 = vxpose.xlu0.b32.cont [15/16] 0.0, 128
        %969 = vxpose.xlu0.b32.end [16/16] 0.0, 128
        %v970 = vpop.trf.xlu0
        %v971 = vpop.trf.xlu0
        %v972 = vpop.trf.xlu0
        %v973 = vpop.trf.xlu0
        %v974 = vpop.trf.xlu0
        %v975 = vpop.trf.xlu0
        %v976 = vpop.trf.xlu0
        %v977 = vpop.trf.xlu0
        %v978 = vpop.trf.xlu0
        %v979 = vpop.trf.xlu0
        %v980 = vpop.trf.xlu0
        %v981 = vpop.trf.xlu0
        %v982 = vpop.trf.xlu0
        %v983 = vpop.trf.xlu0
        %v984 = vpop.trf.xlu0
        %v985 = vpop.trf.xlu0
        %986 = vxpose.xlu0.b32.start [1/16] %v761, 128
        %987 = vxpose.xlu0.b32.cont [2/16] 0.0, 128
        %988 = vxpose.xlu0.b32.cont [3/16] 0.0, 128
        %989 = vxpose.xlu0.b32.cont [4/16] 0.0, 128
        %990 = vxpose.xlu0.b32.cont [5/16] 0.0, 128
        %991 = vxpose.xlu0.b32.cont [6/16] 0.0, 128
        %992 = vxpose.xlu0.b32.cont [7/16] 0.0, 128
        %993 = vxpose.xlu0.b32.cont [8/16] 0.0, 128
        %994 = vxpose.xlu0.b32.cont [9/16] 0.0, 128
        %995 = vxpose.xlu0.b32.cont [10/16] 0.0, 128
        %996 = vxpose.xlu0.b32.cont [11/16] 0.0, 128
        %997 = vxpose.xlu0.b32.cont [12/16] 0.0, 128
        %998 = vxpose.xlu0.b32.cont [13/16] 0.0, 128
        %999 = vxpose.xlu0.b32.cont [14/16] 0.0, 128
        %1000 = vxpose.xlu0.b32.cont [15/16] 0.0, 128
        %1001 = vxpose.xlu0.b32.end [16/16] 0.0, 128
        %v1002 = vpop.trf.xlu0
        %v1003 = vpop.trf.xlu0
        %v1004 = vpop.trf.xlu0
        %v1005 = vpop.trf.xlu0
        %v1006 = vpop.trf.xlu0
        %v1007 = vpop.trf.xlu0
        %v1008 = vpop.trf.xlu0
        %v1009 = vpop.trf.xlu0
        %v1010 = vpop.trf.xlu0
        %v1011 = vpop.trf.xlu0
        %v1012 = vpop.trf.xlu0
        %v1013 = vpop.trf.xlu0
        %v1014 = vpop.trf.xlu0
        %v1015 = vpop.trf.xlu0
        %v1016 = vpop.trf.xlu0
        %v1017 = vpop.trf.xlu0
        %v1018 = vpack.c.bf16 %v779, %v778
        %v1019 = vpack.c.bf16 %v811, %v810
        %v1020 = vpack.c.bf16 %v843, %v842
        %v1021 = vpack.c.bf16 %v875, %v874
        %v1022 = vpack.c.bf16 %v907, %v906
        %v1023 = vpack.c.bf16 %v939, %v938
        %v1024 = vpack.c.bf16 %v971, %v970
        %v1025 = vpack.c.bf16 %v1003, %v1002
        %s1026 = scalar_lea.vmem %s2, 2
        %v1027 = vld [vmem:[%s1026] sm:$0x3]
        %v1029 = vsel %vm520, %v1018, 0
        %v1032 = vsel %vm520, %v1019, 0
        %v1035 = vsel %vm520, %v1020, 0
        %v1038 = vsel %vm520, %v1021, 0
        %v1041 = vsel %vm520, %v1022, 0
        %v1044 = vsel %vm520, %v1023, 0
        %v1047 = vsel %vm520, %v1024, 0
        %v1050 = vsel %vm520, %v1025, 0
        %v1053 = vsel %vm545, %v1027, 0
        %1055 = vmatprep.subr.bf16.mxu0 0
        %1056 = vmatpush1.bf16.msra.mxu0 %v1053
        %1057 = vmatprep.subr.bf16.mxu0 0
        %1058 = vmatpush1.bf16.msra.mxu0 0
        %1059 = vmatprep.subr.bf16.mxu0 0
        %1060 = vmatpush1.bf16.msra.mxu0 0
        %1061 = vmatprep.subr.bf16.mxu0 0
        %1062 = vmatpush1.bf16.msra.mxu0 0
        %1063 = vmatprep.subr.bf16.mxu0 0
        %1064 = vmatpush1.bf16.msra.mxu0 0
        %1065 = vmatprep.subr.bf16.mxu0 0
        %1066 = vmatpush1.bf16.msra.mxu0 0
        %1067 = vmatprep.subr.bf16.mxu0 0
        %1068 = vmatpush1.bf16.msra.mxu0 0
        %1069 = vmatprep.subr.bf16.mxu0 0
        %1070 = vmatpush1.bf16.msra.mxu0 0
        %1071 = vmatprep.subr.bf16.mxu0 0
        %1072 = vmatpush1.bf16.msra.mxu0 0
        %1073 = vmatprep.subr.bf16.mxu0 0
        %1074 = vmatpush1.bf16.msra.mxu0 0
        %1075 = vmatprep.subr.bf16.mxu0 0
        %1076 = vmatpush1.bf16.msra.mxu0 0
        %1077 = vmatprep.subr.bf16.mxu0 0
        %1078 = vmatpush1.bf16.msra.mxu0 0
        %1079 = vmatprep.subr.bf16.mxu0 0
        %1080 = vmatpush1.bf16.msra.mxu0 0
        %1081 = vmatprep.subr.bf16.mxu0 0
        %1082 = vmatpush1.bf16.msra.mxu0 0
        %1083 = vmatprep.subr.bf16.mxu0 0
        %1084 = vmatpush1.bf16.msra.mxu0 0
        %1085 = vmatprep.subr.bf16.mxu0 0
        %1086 = vmatpush1.bf16.msra.mxu0 0
        %1087 = vmatprep.mubr.bf16.mxu0 0
        %1088 = vmatmul.mubr.bf16.gmra.mrb[0].mxu0 %v1029
        %v1089 = vpop.f32.mrb[0].mxu0
        %v1090 = vadd.f32 0.0, %v1089
        %v1091 = vpop.f32.mrb[0].mxu0
        %v1092 = vpop.f32.mrb[0].mxu0
        %v1093 = vadd.f32 0.0, %v1092
        %v1094 = vpop.f32.mrb[0].mxu0
        %1095 = vmatprep.mubr.bf16.mxu0 0
        %1096 = vmatmul.mubr.bf16.gmra.mrb[0].mxu0 %v1032
        %v1097 = vpop.f32.mrb[0].mxu0
        %v1098 = vadd.f32 0.0, %v1097
        %v1099 = vpop.f32.mrb[0].mxu0
        %v1100 = vpop.f32.mrb[0].mxu0
        %v1101 = vadd.f32 0.0, %v1100
        %v1102 = vpop.f32.mrb[0].mxu0
        %1103 = vmatprep.mubr.bf16.mxu0 0
        %1104 = vmatmul.mubr.bf16.gmra.mrb[0].mxu0 %v1035
        %v1105 = vpop.f32.mrb[0].mxu0
        %v1106 = vadd.f32 0.0, %v1105
        %v1107 = vpop.f32.mrb[0].mxu0
        %v1108 = vpop.f32.mrb[0].mxu0
        %v1109 = vadd.f32 0.0, %v1108
        %v1110 = vpop.f32.mrb[0].mxu0
        %1111 = vmatprep.mubr.bf16.mxu0 0
        %1112 = vmatmul.mubr.bf16.gmra.mrb[0].mxu0 %v1038
        %v1113 = vpop.f32.mrb[0].mxu0
        %v1114 = vadd.f32 0.0, %v1113
        %v1115 = vpop.f32.mrb[0].mxu0
        %v1116 = vpop.f32.mrb[0].mxu0
        %v1117 = vadd.f32 0.0, %v1116
        %v1118 = vpop.f32.mrb[0].mxu0
        %1119 = vmatprep.mubr.bf16.mxu0 0
        %1120 = vmatmul.mubr.bf16.gmra.mrb[0].mxu0 %v1041
        %v1121 = vpop.f32.mrb[0].mxu0
        %v1122 = vadd.f32 0.0, %v1121
        %v1123 = vpop.f32.mrb[0].mxu0
        %v1124 = vpop.f32.mrb[0].mxu0
        %v1125 = vadd.f32 0.0, %v1124
        %v1126 = vpop.f32.mrb[0].mxu0
        %1127 = vmatprep.mubr.bf16.mxu0 0
        %1128 = vmatmul.mubr.bf16.gmra.mrb[0].mxu0 %v1044
        %v1129 = vpop.f32.mrb[0].mxu0
        %v1130 = vadd.f32 0.0, %v1129
        %v1131 = vpop.f32.mrb[0].mxu0
        %v1132 = vpop.f32.mrb[0].mxu0
        %v1133 = vadd.f32 0.0, %v1132
        %v1134 = vpop.f32.mrb[0].mxu0
        %1135 = vmatprep.mubr.bf16.mxu0 0
        %1136 = vmatmul.mubr.bf16.gmra.mrb[0].mxu0 %v1047
        %v1137 = vpop.f32.mrb[0].mxu0
        %v1138 = vadd.f32 0.0, %v1137
        %v1139 = vpop.f32.mrb[0].mxu0
        %v1140 = vpop.f32.mrb[0].mxu0
        %v1141 = vadd.f32 0.0, %v1140
        %v1142 = vpop.f32.mrb[0].mxu0
        %1143 = vmatprep.mubr.bf16.mxu0 0
        %1144 = vmatmul.mubr.bf16.gmra.mrb[0].mxu0 %v1050
        %v1145 = vpop.f32.mrb[0].mxu0
        %v1146 = vadd.f32 0.0, %v1145
        %v1147 = vpop.f32.mrb[0].mxu0
        %v1148 = vpop.f32.mrb[0].mxu0
        %v1149 = vadd.f32 0.0, %v1148
        %v1150 = vpop.f32.mrb[0].mxu0
        %1151 = vdwg.mxu0
        %v1152 = vadd.f32 %v584, %v1090
        %v1153 = vadd.f32 %v587, %v1093
        %v1154 = vadd.f32 %v592, %v1098
        %v1155 = vadd.f32 %v595, %v1101
        %v1156 = vadd.f32 %v600, %v1106
        %v1157 = vadd.f32 %v603, %v1109
        %v1158 = vadd.f32 %v608, %v1114
        %v1159 = vadd.f32 %v611, %v1117
        %v1160 = vadd.f32 %v616, %v1122
        %v1161 = vadd.f32 %v619, %v1125
        %v1162 = vadd.f32 %v624, %v1130
        %v1163 = vadd.f32 %v627, %v1133
        %v1164 = vadd.f32 %v632, %v1138
        %v1165 = vadd.f32 %v635, %v1141
        %v1166 = vadd.f32 %v640, %v1146
        %v1167 = vadd.f32 %v643, %v1149
        %v1176 = vcombine.low %v754, %v755
        %v1177 = vcombine.low %v756, %v757
        %v1178 = vcombine.low %v758, %v759
        %v1179 = vcombine.low %v760, %v761
        %v1184 = vpack.c.bf16 %v1177, %v1176
        %v1185 = vpack.c.bf16 %v1179, %v1178
        %v1187 = vsel %vm670, %v1184, 0
        %v1190 = vsel %vm670, %v1185, 0
        %1192 = vmatprep.subr.bf16.mxu0 0
        %1193 = vmatpush1.bf16.msra.mxu0 %v668
        %1194 = vmatprep.subr.bf16.mxu0 0
        %1195 = vmatpush1.bf16.msra.mxu0 0
        %1196 = vmatprep.subr.bf16.mxu0 0
        %1197 = vmatpush1.bf16.msra.mxu0 0
        %1198 = vmatprep.subr.bf16.mxu0 0
        %1199 = vmatpush1.bf16.msra.mxu0 0
        %1200 = vmatprep.subr.bf16.mxu0 0
        %1201 = vmatpush1.bf16.msra.mxu0 0
        %1202 = vmatprep.subr.bf16.mxu0 0
        %1203 = vmatpush1.bf16.msra.mxu0 0
        %1204 = vmatprep.subr.bf16.mxu0 0
        %1205 = vmatpush1.bf16.msra.mxu0 0
        %1206 = vmatprep.subr.bf16.mxu0 0
        %1207 = vmatpush1.bf16.msra.mxu0 0
        %1208 = vmatprep.subr.bf16.mxu0 0
        %1209 = vmatpush1.bf16.msra.mxu0 0
        %1210 = vmatprep.subr.bf16.mxu0 0
        %1211 = vmatpush1.bf16.msra.mxu0 0
        %1212 = vmatprep.subr.bf16.mxu0 0
        %1213 = vmatpush1.bf16.msra.mxu0 0
        %1214 = vmatprep.subr.bf16.mxu0 0
        %1215 = vmatpush1.bf16.msra.mxu0 0
        %1216 = vmatprep.subr.bf16.mxu0 0
        %1217 = vmatpush1.bf16.msra.mxu0 0
        %1218 = vmatprep.subr.bf16.mxu0 0
        %1219 = vmatpush1.bf16.msra.mxu0 0
        %1220 = vmatprep.subr.bf16.mxu0 0
        %1221 = vmatpush1.bf16.msra.mxu0 0
        %1222 = vmatprep.subr.bf16.mxu0 0
        %1223 = vmatpush1.bf16.msra.mxu0 0
        %1224 = vmatprep.mubr.bf16.mxu0 0
        %1225 = vmatmul.mubr.bf16.gmra.mrb[0].mxu0 %v1187
        %v1226 = vpop.f32.mrb[0].mxu0
        %v1227 = vadd.f32 0.0, %v1226
        %v1228 = vpop.f32.mrb[0].mxu0
        %v1229 = vpop.f32.mrb[0].mxu0
        %v1230 = vadd.f32 0.0, %v1229
        %v1231 = vpop.f32.mrb[0].mxu0
        %1232 = vmatprep.mubr.bf16.mxu0 0
        %1233 = vmatmul.mubr.bf16.gmra.mrb[0].mxu0 %v1190
        %v1234 = vpop.f32.mrb[0].mxu0
        %v1235 = vadd.f32 0.0, %v1234
        %v1236 = vpop.f32.mrb[0].mxu0
        %v1237 = vpop.f32.mrb[0].mxu0
        %v1238 = vadd.f32 0.0, %v1237
        %v1239 = vpop.f32.mrb[0].mxu0
        %1240 = vdwg.mxu0
        %v1245 = vcombine.high %v1227, %v1227
        %v1246 = vcombine.high %v1230, %v1230
        %v1247 = vcombine.high %v1235, %v1235
        %v1248 = vcombine.high %v1238, %v1238
        %v1253 = vmul.f32 %v1227, 0.95
        %v1254 = vmul.f32 %v1245, 0.95
        %v1255 = vmul.f32 %v1230, 0.95
        %v1256 = vmul.f32 %v1246, 0.95
        %v1257 = vmul.f32 %v1235, 0.95
        %v1258 = vmul.f32 %v1247, 0.95
        %v1259 = vmul.f32 %v1238, 0.95
        %v1260 = vmul.f32 %v1248, 0.95
        %v1261 = vadd.f32 %v738, %v1253
        %v1262 = vadd.f32 %v739, %v1254
        %v1263 = vadd.f32 %v740, %v1255
        %v1264 = vadd.f32 %v741, %v1256
        %v1265 = vadd.f32 %v742, %v1257
        %v1266 = vadd.f32 %v743, %v1258
        %v1267 = vadd.f32 %v744, %v1259
        %v1268 = vadd.f32 %v745, %v1260
        %1269 = vxpose.xlu0.b32.start [1/16] %v1261, 128
        %1270 = vxpose.xlu0.b32.cont [2/16] 0.0, 128
        %1271 = vxpose.xlu0.b32.cont [3/16] 0.0, 128
        %1272 = vxpose.xlu0.b32.cont [4/16] 0.0, 128
        %1273 = vxpose.xlu0.b32.cont [5/16] 0.0, 128
        %1274 = vxpose.xlu0.b32.cont [6/16] 0.0, 128
        %1275 = vxpose.xlu0.b32.cont [7/16] 0.0, 128
        %1276 = vxpose.xlu0.b32.cont [8/16] 0.0, 128
        %1277 = vxpose.xlu0.b32.cont [9/16] 0.0, 128
        %1278 = vxpose.xlu0.b32.cont [10/16] 0.0, 128
        %1279 = vxpose.xlu0.b32.cont [11/16] 0.0, 128
        %1280 = vxpose.xlu0.b32.cont [12/16] 0.0, 128
        %1281 = vxpose.xlu0.b32.cont [13/16] 0.0, 128
        %1282 = vxpose.xlu0.b32.cont [14/16] 0.0, 128
        %1283 = vxpose.xlu0.b32.cont [15/16] 0.0, 128
        %1284 = vxpose.xlu0.b32.end [16/16] 0.0, 128
        %v1285 = vpop.trf.xlu0
        %v1286 = vpop.trf.xlu0
        %v1287 = vpop.trf.xlu0
        %v1288 = vpop.trf.xlu0
        %v1289 = vpop.trf.xlu0
        %v1290 = vpop.trf.xlu0
        %v1291 = vpop.trf.xlu0
        %v1292 = vpop.trf.xlu0
        %v1293 = vpop.trf.xlu0
        %v1294 = vpop.trf.xlu0
        %v1295 = vpop.trf.xlu0
        %v1296 = vpop.trf.xlu0
        %v1297 = vpop.trf.xlu0
        %v1298 = vpop.trf.xlu0
        %v1299 = vpop.trf.xlu0
        %v1300 = vpop.trf.xlu0
        %1301 = vxpose.xlu0.b32.start [1/16] %v1262, 128
        %1302 = vxpose.xlu0.b32.cont [2/16] 0.0, 128
        %1303 = vxpose.xlu0.b32.cont [3/16] 0.0, 128
        %1304 = vxpose.xlu0.b32.cont [4/16] 0.0, 128
        %1305 = vxpose.xlu0.b32.cont [5/16] 0.0, 128
        %1306 = vxpose.xlu0.b32.cont [6/16] 0.0, 128
        %1307 = vxpose.xlu0.b32.cont [7/16] 0.0, 128
        %1308 = vxpose.xlu0.b32.cont [8/16] 0.0, 128
        %1309 = vxpose.xlu0.b32.cont [9/16] 0.0, 128
        %1310 = vxpose.xlu0.b32.cont [10/16] 0.0, 128
        %1311 = vxpose.xlu0.b32.cont [11/16] 0.0, 128
        %1312 = vxpose.xlu0.b32.cont [12/16] 0.0, 128
        %1313 = vxpose.xlu0.b32.cont [13/16] 0.0, 128
        %1314 = vxpose.xlu0.b32.cont [14/16] 0.0, 128
        %1315 = vxpose.xlu0.b32.cont [15/16] 0.0, 128
        %1316 = vxpose.xlu0.b32.end [16/16] 0.0, 128
        %v1317 = vpop.trf.xlu0
        %v1318 = vpop.trf.xlu0
        %v1319 = vpop.trf.xlu0
        %v1320 = vpop.trf.xlu0
        %v1321 = vpop.trf.xlu0
        %v1322 = vpop.trf.xlu0
        %v1323 = vpop.trf.xlu0
        %v1324 = vpop.trf.xlu0
        %v1325 = vpop.trf.xlu0
        %v1326 = vpop.trf.xlu0
        %v1327 = vpop.trf.xlu0
        %v1328 = vpop.trf.xlu0
        %v1329 = vpop.trf.xlu0
        %v1330 = vpop.trf.xlu0
        %v1331 = vpop.trf.xlu0
        %v1332 = vpop.trf.xlu0
        %1333 = vxpose.xlu0.b32.start [1/16] %v1263, 128
        %1334 = vxpose.xlu0.b32.cont [2/16] 0.0, 128
        %1335 = vxpose.xlu0.b32.cont [3/16] 0.0, 128
        %1336 = vxpose.xlu0.b32.cont [4/16] 0.0, 128
        %1337 = vxpose.xlu0.b32.cont [5/16] 0.0, 128
        %1338 = vxpose.xlu0.b32.cont [6/16] 0.0, 128
        %1339 = vxpose.xlu0.b32.cont [7/16] 0.0, 128
        %1340 = vxpose.xlu0.b32.cont [8/16] 0.0, 128
        %1341 = vxpose.xlu0.b32.cont [9/16] 0.0, 128
        %1342 = vxpose.xlu0.b32.cont [10/16] 0.0, 128
        %1343 = vxpose.xlu0.b32.cont [11/16] 0.0, 128
        %1344 = vxpose.xlu0.b32.cont [12/16] 0.0, 128
        %1345 = vxpose.xlu0.b32.cont [13/16] 0.0, 128
        %1346 = vxpose.xlu0.b32.cont [14/16] 0.0, 128
        %1347 = vxpose.xlu0.b32.cont [15/16] 0.0, 128
        %1348 = vxpose.xlu0.b32.end [16/16] 0.0, 128
        %v1349 = vpop.trf.xlu0
        %v1350 = vpop.trf.xlu0
        %v1351 = vpop.trf.xlu0
        %v1352 = vpop.trf.xlu0
        %v1353 = vpop.trf.xlu0
        %v1354 = vpop.trf.xlu0
        %v1355 = vpop.trf.xlu0
        %v1356 = vpop.trf.xlu0
        %v1357 = vpop.trf.xlu0
        %v1358 = vpop.trf.xlu0
        %v1359 = vpop.trf.xlu0
        %v1360 = vpop.trf.xlu0
        %v1361 = vpop.trf.xlu0
        %v1362 = vpop.trf.xlu0
        %v1363 = vpop.trf.xlu0
        %v1364 = vpop.trf.xlu0
        %1365 = vxpose.xlu0.b32.start [1/16] %v1264, 128
        %1366 = vxpose.xlu0.b32.cont [2/16] 0.0, 128
        %1367 = vxpose.xlu0.b32.cont [3/16] 0.0, 128
        %1368 = vxpose.xlu0.b32.cont [4/16] 0.0, 128
        %1369 = vxpose.xlu0.b32.cont [5/16] 0.0, 128
        %1370 = vxpose.xlu0.b32.cont [6/16] 0.0, 128
        %1371 = vxpose.xlu0.b32.cont [7/16] 0.0, 128
        %1372 = vxpose.xlu0.b32.cont [8/16] 0.0, 128
        %1373 = vxpose.xlu0.b32.cont [9/16] 0.0, 128
        %1374 = vxpose.xlu0.b32.cont [10/16] 0.0, 128
        %1375 = vxpose.xlu0.b32.cont [11/16] 0.0, 128
        %1376 = vxpose.xlu0.b32.cont [12/16] 0.0, 128
        %1377 = vxpose.xlu0.b32.cont [13/16] 0.0, 128
        %1378 = vxpose.xlu0.b32.cont [14/16] 0.0, 128
        %1379 = vxpose.xlu0.b32.cont [15/16] 0.0, 128
        %1380 = vxpose.xlu0.b32.end [16/16] 0.0, 128
        %v1381 = vpop.trf.xlu0
        %v1382 = vpop.trf.xlu0
        %v1383 = vpop.trf.xlu0
        %v1384 = vpop.trf.xlu0
        %v1385 = vpop.trf.xlu0
        %v1386 = vpop.trf.xlu0
        %v1387 = vpop.trf.xlu0
        %v1388 = vpop.trf.xlu0
        %v1389 = vpop.trf.xlu0
        %v1390 = vpop.trf.xlu0
        %v1391 = vpop.trf.xlu0
        %v1392 = vpop.trf.xlu0
        %v1393 = vpop.trf.xlu0
        %v1394 = vpop.trf.xlu0
        %v1395 = vpop.trf.xlu0
        %v1396 = vpop.trf.xlu0
        %1397 = vxpose.xlu0.b32.start [1/16] %v1265, 128
        %1398 = vxpose.xlu0.b32.cont [2/16] 0.0, 128
        %1399 = vxpose.xlu0.b32.cont [3/16] 0.0, 128
        %1400 = vxpose.xlu0.b32.cont [4/16] 0.0, 128
        %1401 = vxpose.xlu0.b32.cont [5/16] 0.0, 128
        %1402 = vxpose.xlu0.b32.cont [6/16] 0.0, 128
        %1403 = vxpose.xlu0.b32.cont [7/16] 0.0, 128
        %1404 = vxpose.xlu0.b32.cont [8/16] 0.0, 128
        %1405 = vxpose.xlu0.b32.cont [9/16] 0.0, 128
        %1406 = vxpose.xlu0.b32.cont [10/16] 0.0, 128
        %1407 = vxpose.xlu0.b32.cont [11/16] 0.0, 128
        %1408 = vxpose.xlu0.b32.cont [12/16] 0.0, 128
        %1409 = vxpose.xlu0.b32.cont [13/16] 0.0, 128
        %1410 = vxpose.xlu0.b32.cont [14/16] 0.0, 128
        %1411 = vxpose.xlu0.b32.cont [15/16] 0.0, 128
        %1412 = vxpose.xlu0.b32.end [16/16] 0.0, 128
        %v1413 = vpop.trf.xlu0
        %v1414 = vpop.trf.xlu0
        %v1415 = vpop.trf.xlu0
        %v1416 = vpop.trf.xlu0
        %v1417 = vpop.trf.xlu0
        %v1418 = vpop.trf.xlu0
        %v1419 = vpop.trf.xlu0
        %v1420 = vpop.trf.xlu0
        %v1421 = vpop.trf.xlu0
        %v1422 = vpop.trf.xlu0
        %v1423 = vpop.trf.xlu0
        %v1424 = vpop.trf.xlu0
        %v1425 = vpop.trf.xlu0
        %v1426 = vpop.trf.xlu0
        %v1427 = vpop.trf.xlu0
        %v1428 = vpop.trf.xlu0
        %1429 = vxpose.xlu0.b32.start [1/16] %v1266, 128
        %1430 = vxpose.xlu0.b32.cont [2/16] 0.0, 128
        %1431 = vxpose.xlu0.b32.cont [3/16] 0.0, 128
        %1432 = vxpose.xlu0.b32.cont [4/16] 0.0, 128
        %1433 = vxpose.xlu0.b32.cont [5/16] 0.0, 128
        %1434 = vxpose.xlu0.b32.cont [6/16] 0.0, 128
        %1435 = vxpose.xlu0.b32.cont [7/16] 0.0, 128
        %1436 = vxpose.xlu0.b32.cont [8/16] 0.0, 128
        %1437 = vxpose.xlu0.b32.cont [9/16] 0.0, 128
        %1438 = vxpose.xlu0.b32.cont [10/16] 0.0, 128
        %1439 = vxpose.xlu0.b32.cont [11/16] 0.0, 128
        %1440 = vxpose.xlu0.b32.cont [12/16] 0.0, 128
        %1441 = vxpose.xlu0.b32.cont [13/16] 0.0, 128
        %1442 = vxpose.xlu0.b32.cont [14/16] 0.0, 128
        %1443 = vxpose.xlu0.b32.cont [15/16] 0.0, 128
        %1444 = vxpose.xlu0.b32.end [16/16] 0.0, 128
        %v1445 = vpop.trf.xlu0
        %v1446 = vpop.trf.xlu0
        %v1447 = vpop.trf.xlu0
        %v1448 = vpop.trf.xlu0
        %v1449 = vpop.trf.xlu0
        %v1450 = vpop.trf.xlu0
        %v1451 = vpop.trf.xlu0
        %v1452 = vpop.trf.xlu0
        %v1453 = vpop.trf.xlu0
        %v1454 = vpop.trf.xlu0
        %v1455 = vpop.trf.xlu0
        %v1456 = vpop.trf.xlu0
        %v1457 = vpop.trf.xlu0
        %v1458 = vpop.trf.xlu0
        %v1459 = vpop.trf.xlu0
        %v1460 = vpop.trf.xlu0
        %1461 = vxpose.xlu0.b32.start [1/16] %v1267, 128
        %1462 = vxpose.xlu0.b32.cont [2/16] 0.0, 128
        %1463 = vxpose.xlu0.b32.cont [3/16] 0.0, 128
        %1464 = vxpose.xlu0.b32.cont [4/16] 0.0, 128
        %1465 = vxpose.xlu0.b32.cont [5/16] 0.0, 128
        %1466 = vxpose.xlu0.b32.cont [6/16] 0.0, 128
        %1467 = vxpose.xlu0.b32.cont [7/16] 0.0, 128
        %1468 = vxpose.xlu0.b32.cont [8/16] 0.0, 128
        %1469 = vxpose.xlu0.b32.cont [9/16] 0.0, 128
        %1470 = vxpose.xlu0.b32.cont [10/16] 0.0, 128
        %1471 = vxpose.xlu0.b32.cont [11/16] 0.0, 128
        %1472 = vxpose.xlu0.b32.cont [12/16] 0.0, 128
        %1473 = vxpose.xlu0.b32.cont [13/16] 0.0, 128
        %1474 = vxpose.xlu0.b32.cont [14/16] 0.0, 128
        %1475 = vxpose.xlu0.b32.cont [15/16] 0.0, 128
        %1476 = vxpose.xlu0.b32.end [16/16] 0.0, 128
        %v1477 = vpop.trf.xlu0
        %v1478 = vpop.trf.xlu0
        %v1479 = vpop.trf.xlu0
        %v1480 = vpop.trf.xlu0
        %v1481 = vpop.trf.xlu0
        %v1482 = vpop.trf.xlu0
        %v1483 = vpop.trf.xlu0
        %v1484 = vpop.trf.xlu0
        %v1485 = vpop.trf.xlu0
        %v1486 = vpop.trf.xlu0
        %v1487 = vpop.trf.xlu0
        %v1488 = vpop.trf.xlu0
        %v1489 = vpop.trf.xlu0
        %v1490 = vpop.trf.xlu0
        %v1491 = vpop.trf.xlu0
        %v1492 = vpop.trf.xlu0
        %1493 = vxpose.xlu0.b32.start [1/16] %v1268, 128
        %1494 = vxpose.xlu0.b32.cont [2/16] 0.0, 128
        %1495 = vxpose.xlu0.b32.cont [3/16] 0.0, 128
        %1496 = vxpose.xlu0.b32.cont [4/16] 0.0, 128
        %1497 = vxpose.xlu0.b32.cont [5/16] 0.0, 128
        %1498 = vxpose.xlu0.b32.cont [6/16] 0.0, 128
        %1499 = vxpose.xlu0.b32.cont [7/16] 0.0, 128
        %1500 = vxpose.xlu0.b32.cont [8/16] 0.0, 128
        %1501 = vxpose.xlu0.b32.cont [9/16] 0.0, 128
        %1502 = vxpose.xlu0.b32.cont [10/16] 0.0, 128
        %1503 = vxpose.xlu0.b32.cont [11/16] 0.0, 128
        %1504 = vxpose.xlu0.b32.cont [12/16] 0.0, 128
        %1505 = vxpose.xlu0.b32.cont [13/16] 0.0, 128
        %1506 = vxpose.xlu0.b32.cont [14/16] 0.0, 128
        %1507 = vxpose.xlu0.b32.cont [15/16] 0.0, 128
        %1508 = vxpose.xlu0.b32.end [16/16] 0.0, 128
        %v1509 = vpop.trf.xlu0
        %v1510 = vpop.trf.xlu0
        %v1511 = vpop.trf.xlu0
        %v1512 = vpop.trf.xlu0
        %v1513 = vpop.trf.xlu0
        %v1514 = vpop.trf.xlu0
        %v1515 = vpop.trf.xlu0
        %v1516 = vpop.trf.xlu0
        %v1517 = vpop.trf.xlu0
        %v1518 = vpop.trf.xlu0
        %v1519 = vpop.trf.xlu0
        %v1520 = vpop.trf.xlu0
        %v1521 = vpop.trf.xlu0
        %v1522 = vpop.trf.xlu0
        %v1523 = vpop.trf.xlu0
        %v1524 = vpop.trf.xlu0
        %v1525 = vpack.c.bf16 %v1286, %v1285
        %v1526 = vpack.c.bf16 %v1318, %v1317
        %v1527 = vpack.c.bf16 %v1350, %v1349
        %v1528 = vpack.c.bf16 %v1382, %v1381
        %v1529 = vpack.c.bf16 %v1414, %v1413
        %v1530 = vpack.c.bf16 %v1446, %v1445
        %v1531 = vpack.c.bf16 %v1478, %v1477
        %v1532 = vpack.c.bf16 %v1510, %v1509
        %s1533 = scalar_lea.vmem %s2, 4
        %v1534 = vld [vmem:[%s1533] sm:$0x3]
        %v1536 = vsel %vm520, %v1525, 0
        %v1539 = vsel %vm520, %v1526, 0
        %v1542 = vsel %vm520, %v1527, 0
        %v1545 = vsel %vm520, %v1528, 0
        %v1548 = vsel %vm520, %v1529, 0
        %v1551 = vsel %vm520, %v1530, 0
        %v1554 = vsel %vm520, %v1531, 0
        %v1557 = vsel %vm520, %v1532, 0
        %v1560 = vsel %vm545, %v1534, 0
        %1562 = vmatprep.subr.bf16.mxu0 0
        %1563 = vmatpush1.bf16.msra.mxu0 %v1560
        %1564 = vmatprep.subr.bf16.mxu0 0
        %1565 = vmatpush1.bf16.msra.mxu0 0
        %1566 = vmatprep.subr.bf16.mxu0 0
        %1567 = vmatpush1.bf16.msra.mxu0 0
        %1568 = vmatprep.subr.bf16.mxu0 0
        %1569 = vmatpush1.bf16.msra.mxu0 0
        %1570 = vmatprep.subr.bf16.mxu0 0
        %1571 = vmatpush1.bf16.msra.mxu0 0
        %1572 = vmatprep.subr.bf16.mxu0 0
        %1573 = vmatpush1.bf16.msra.mxu0 0
        %1574 = vmatprep.subr.bf16.mxu0 0
        %1575 = vmatpush1.bf16.msra.mxu0 0
        %1576 = vmatprep.subr.bf16.mxu0 0
        %1577 = vmatpush1.bf16.msra.mxu0 0
        %1578 = vmatprep.subr.bf16.mxu0 0
        %1579 = vmatpush1.bf16.msra.mxu0 0
        %1580 = vmatprep.subr.bf16.mxu0 0
        %1581 = vmatpush1.bf16.msra.mxu0 0
        %1582 = vmatprep.subr.bf16.mxu0 0
        %1583 = vmatpush1.bf16.msra.mxu0 0
        %1584 = vmatprep.subr.bf16.mxu0 0
        %1585 = vmatpush1.bf16.msra.mxu0 0
        %1586 = vmatprep.subr.bf16.mxu0 0
        %1587 = vmatpush1.bf16.msra.mxu0 0
        %1588 = vmatprep.subr.bf16.mxu0 0
        %1589 = vmatpush1.bf16.msra.mxu0 0
        %1590 = vmatprep.subr.bf16.mxu0 0
        %1591 = vmatpush1.bf16.msra.mxu0 0
        %1592 = vmatprep.subr.bf16.mxu0 0
        %1593 = vmatpush1.bf16.msra.mxu0 0
        %1594 = vmatprep.mubr.bf16.mxu0 0
        %1595 = vmatmul.mubr.bf16.gmra.mrb[0].mxu0 %v1536
        %v1596 = vpop.f32.mrb[0].mxu0
        %v1597 = vadd.f32 0.0, %v1596
        %v1598 = vpop.f32.mrb[0].mxu0
        %v1599 = vpop.f32.mrb[0].mxu0
        %v1600 = vadd.f32 0.0, %v1599
        %v1601 = vpop.f32.mrb[0].mxu0
        %1602 = vmatprep.mubr.bf16.mxu0 0
        %1603 = vmatmul.mubr.bf16.gmra.mrb[0].mxu0 %v1539
        %v1604 = vpop.f32.mrb[0].mxu0
        %v1605 = vadd.f32 0.0, %v1604
        %v1606 = vpop.f32.mrb[0].mxu0
        %v1607 = vpop.f32.mrb[0].mxu0
        %v1608 = vadd.f32 0.0, %v1607
        %v1609 = vpop.f32.mrb[0].mxu0
        %1610 = vmatprep.mubr.bf16.mxu0 0
        %1611 = vmatmul.mubr.bf16.gmra.mrb[0].mxu0 %v1542
        %v1612 = vpop.f32.mrb[0].mxu0
        %v1613 = vadd.f32 0.0, %v1612
        %v1614 = vpop.f32.mrb[0].mxu0
        %v1615 = vpop.f32.mrb[0].mxu0
        %v1616 = vadd.f32 0.0, %v1615
        %v1617 = vpop.f32.mrb[0].mxu0
        %1618 = vmatprep.mubr.bf16.mxu0 0
        %1619 = vmatmul.mubr.bf16.gmra.mrb[0].mxu0 %v1545
        %v1620 = vpop.f32.mrb[0].mxu0
        %v1621 = vadd.f32 0.0, %v1620
        %v1622 = vpop.f32.mrb[0].mxu0
        %v1623 = vpop.f32.mrb[0].mxu0
        %v1624 = vadd.f32 0.0, %v1623
        %v1625 = vpop.f32.mrb[0].mxu0
        %1626 = vmatprep.mubr.bf16.mxu0 0
        %1627 = vmatmul.mubr.bf16.gmra.mrb[0].mxu0 %v1548
        %v1628 = vpop.f32.mrb[0].mxu0
        %v1629 = vadd.f32 0.0, %v1628
        %v1630 = vpop.f32.mrb[0].mxu0
        %v1631 = vpop.f32.mrb[0].mxu0
        %v1632 = vadd.f32 0.0, %v1631
        %v1633 = vpop.f32.mrb[0].mxu0
        %1634 = vmatprep.mubr.bf16.mxu0 0
        %1635 = vmatmul.mubr.bf16.gmra.mrb[0].mxu0 %v1551
        %v1636 = vpop.f32.mrb[0].mxu0
        %v1637 = vadd.f32 0.0, %v1636
        %v1638 = vpop.f32.mrb[0].mxu0
        %v1639 = vpop.f32.mrb[0].mxu0
        %v1640 = vadd.f32 0.0, %v1639
        %v1641 = vpop.f32.mrb[0].mxu0
        %1642 = vmatprep.mubr.bf16.mxu0 0
        %1643 = vmatmul.mubr.bf16.gmra.mrb[0].mxu0 %v1554
        %v1644 = vpop.f32.mrb[0].mxu0
        %v1645 = vadd.f32 0.0, %v1644
        %v1646 = vpop.f32.mrb[0].mxu0
        %v1647 = vpop.f32.mrb[0].mxu0
        %v1648 = vadd.f32 0.0, %v1647
        %v1649 = vpop.f32.mrb[0].mxu0
        %1650 = vmatprep.mubr.bf16.mxu0 0
        %1651 = vmatmul.mubr.bf16.gmra.mrb[0].mxu0 %v1557
        %v1652 = vpop.f32.mrb[0].mxu0
        %v1653 = vadd.f32 0.0, %v1652
        %v1654 = vpop.f32.mrb[0].mxu0
        %v1655 = vpop.f32.mrb[0].mxu0
        %v1656 = vadd.f32 0.0, %v1655
        %v1657 = vpop.f32.mrb[0].mxu0
        %1658 = vdwg.mxu0
        %v1659 = vadd.f32 %v1152, %v1597
        %v1660 = vadd.f32 %v1153, %v1600
        %v1661 = vadd.f32 %v1154, %v1605
        %v1662 = vadd.f32 %v1155, %v1608
        %v1663 = vadd.f32 %v1156, %v1613
        %v1664 = vadd.f32 %v1157, %v1616
        %v1665 = vadd.f32 %v1158, %v1621
        %v1666 = vadd.f32 %v1159, %v1624
        %v1667 = vadd.f32 %v1160, %v1629
        %v1668 = vadd.f32 %v1161, %v1632
        %v1669 = vadd.f32 %v1162, %v1637
        %v1670 = vadd.f32 %v1163, %v1640
        %v1671 = vadd.f32 %v1164, %v1645
        %v1672 = vadd.f32 %v1165, %v1648
        %v1673 = vadd.f32 %v1166, %v1653
        %v1674 = vadd.f32 %v1167, %v1656
        %vm1675 = vcmask 64512
        %1676 = vst.msk [vmem:[%s235] sm:$0xff] %vm1675, %v1659
        %1677 = vst.msk [vmem:[%s235 + $0x8] sm:$0xff] %vm1675, %v1660
        %1678 = vst.msk [vmem:[%s235 + $0x10] sm:$0xff] %vm1675, %v1661
        %1679 = vst.msk [vmem:[%s235 + $0x18] sm:$0xff] %vm1675, %v1662
        %1680 = vst.msk [vmem:[%s235 + $0x20] sm:$0xff] %vm1675, %v1663
        %1681 = vst.msk [vmem:[%s235 + $0x28] sm:$0xff] %vm1675, %v1664
        %1682 = vst.msk [vmem:[%s235 + $0x30] sm:$0xff] %vm1675, %v1665
        %1683 = vst.msk [vmem:[%s235 + $0x38] sm:$0xff] %vm1675, %v1666
        %1684 = vst.msk [vmem:[%s235 + $0x40] sm:$0xff] %vm1675, %v1667
        %1685 = vst.msk [vmem:[%s235 + $0x48] sm:$0xff] %vm1675, %v1668
        %1686 = vst.msk [vmem:[%s235 + $0x50] sm:$0xff] %vm1675, %v1669
        %1687 = vst.msk [vmem:[%s235 + $0x58] sm:$0xff] %vm1675, %v1670
        %1688 = vst.msk [vmem:[%s235 + $0x60] sm:$0xff] %vm1675, %v1671
        %1689 = vst.msk [vmem:[%s235 + $0x68] sm:$0xff] %vm1675, %v1672
        %1690 = vst.msk [vmem:[%s235 + $0x70] sm:$0xff] %vm1675, %v1673
        %1691 = vst.msk [vmem:[%s235 + $0x78] sm:$0xff] %vm1675, %v1674
        %s1692 = smul.u32 8, %s19
        %p1693 = scmp.lt.s32.totalorder %s1692, 15
        %s1694 = scalar_select %p1693, %s1692, 15
        %s1695 = smul.addr %s1694, 2
        %s1696 = smul.addr %s1695, 8
        %s1697 = scalar_lea.vmem %s4, %s1696
        // Predicated region
        $region45: #{tpu_custom_call.1} parent=35 // pred_check
          %p1698 = pneg %p126
        $region46: #{tpu_custom_call.1} parent=35 // pred_check_branch
          %1700 = sbr.rel (%p1698) target = $region48
        $region47: #{tpu_custom_call.1} parent=35 // pred_region
          %s1701 = smul.u32 8, %s19
        $region48: #{tpu_custom_call.1} parent=35 // pred_fallthru
          _
      $region36: #{tpu_custom_call.1} parent=5 // pred_fallthru
        _
      %p1702 = scmp.le.s32.totalorder 2, %s14
      // Predicated region
      $region49: #{tpu_custom_call.1} parent=5 // pred_check
        %p1703 = pneg %p1702
      $region50: #{tpu_custom_call.1} parent=5 // pred_check_branch
        %1705 = sbr.rel (%p1703) target = $region52
      $region51: #{tpu_custom_call.1} parent=5 // pred_region
        %s1706 = ssub.s32 %s14, 2
        // Predicated region
        $region53: #{tpu_custom_call.1} parent=51 // pred_check
          %p1707 = pneg %p132
        $region54: #{tpu_custom_call.1} parent=51 // pred_check_branch
          %1709 = sbr.rel (%p1707) target = $region56
        $region55: #{tpu_custom_call.1} parent=51 // pred_region
          %s1710 = smul.u32 8, %s20
          %p1711 = scmp.lt.s32.totalorder %s1710, 15
          %s1712 = scalar_select %p1711, %s1710, 15
          %s1713 = smul.addr %s1712, 2
          %s1714 = smul.addr %s1713, 8
          %s1715 = scalar_lea.vmem %s4, %s1714
        $region56: #{tpu_custom_call.1} parent=51 // pred_fallthru
          _
      $region52: #{tpu_custom_call.1} parent=5 // pred_fallthru
        _
    $region6: #{tpu_custom_call.1} parent=1 // loop_footer
      %s18 = sadd.s32 1, %s14
    $region7: #{tpu_custom_call.1} parent=1 // loop_footer_branch
      %13 = sbr.rel target = $region3
    $region8: #{tpu_custom_call.1} parent=1 // loop_exit
      _
    %1716 = vsyncpa [#allocation3], 1
    %s1717 = scalar_lea.sflag [#allocation3], 1
    %1718 = vsyncpa %s1717, 1
    %1719 = vsyncpa [#allocation5], 1

</llo_original>
